<compile_context>
chip_gen: v7x
topology: tpu7x:2x2x1
jax: 0.10.0
libtpu: 0.0.40
codegen_flags: <defaults>
</compile_context>

<pallas_src>
import jax
import jax.numpy as jnp
from jax import lax
from jax.experimental import pallas as pl
from jax.experimental.pallas import tpu as pltpu


# ----------------------------------------------------------------------- kernel


def downsampling_kernel(x_ref, w1_ref, b1_ref, w4_ref, b4_ref, o1_ref, o2_ref):
    """Fused DownSampling.forward for a (bb, L, C) channels-last block."""
    bb, L, C = x_ref.shape
    M = bb * L

    # ---- conv1: single (M, 3C) x (3C, C) bf16 MXU matmul on tap-concatenated x.
    x = x_ref[...].reshape(M, C)                               # flatten batch rows
    row = lax.broadcasted_iota(jnp.int32, (M, 1), 0) % L       # position within batch elem
    x_prev = jnp.where(row >= 1, pltpu.roll(x, shift=1, axis=0), 0.0)      # x[l-1]
    x_next = jnp.where(row <= L - 2, pltpu.roll(x, shift=M - 1, axis=0), 0.0)  # x[l+1]
    x_cat = jnp.concatenate([x_prev, x, x_next], axis=-1).astype(jnp.bfloat16)
    out1 = jnp.dot(x_cat, w1_ref[...],
                   preferred_element_type=jnp.float32) + b1_ref[...]        # f32 (M, C)
    o1_ref[...] = out1.reshape(bb, L, C).astype(o1_ref.dtype)

    # ---- conv2 (+ conv1x1) + AvgPool1d(2) folded into ONE stride-2, 4-tap conv.
    # pooled[m] = 0.5*w2[0]·o1[2m-1] + 0.5*(w2[0]+w2[1]+w1x1)·o1[2m]
    #           + 0.5*(w2[1]+w2[2]+w1x1)·o1[2m+1] + 0.5*w2[2]·o1[2m+2] + (b2+b1x1)
    Lh = L // 2
    Mh = M // 2
    o1_pairs = out1.reshape(Mh, 2 * C)          # row m = [o1[2m] | o1[2m+1]]
    even = o1_pairs[:, :C]                      # o1[2m]
    odd = o1_pairs[:, C:]                       # o1[2m+1]
    rowm = lax.broadcasted_iota(jnp.int32, (Mh, 1), 0) % Lh
    prev_odd = jnp.where(rowm >= 1,                              # o1[2m-1] (0 at m=0)
                         pltpu.roll(odd, shift=1, axis=0), 0.0)
    next_even = jnp.where(rowm <= Lh - 2,                        # o1[2m+2] (0 at m=Lh-1)
                          pltpu.roll(even, shift=Mh - 1, axis=0), 0.0)
    o1_cat4 = jnp.concatenate([prev_odd, even, odd, next_even],
                              axis=-1).astype(jnp.bfloat16)      # (Mh, 4C)
    pooled = jnp.dot(o1_cat4, w4_ref[...],
                     preferred_element_type=jnp.float32) + b4_ref[...]
    o2_ref[...] = jnp.maximum(pooled, 0.0).reshape(bb, Lh, C).astype(o2_ref.dtype)


# ---------------------------------------------------------------------- wrapper


def fold_params(p, use_conv1x1, compute_dtype=jnp.bfloat16):
    """Pre-stack conv1 taps into (3C, C); fold conv2 + conv1x1 + AvgPool(2) into (4C, C).

    Weight convention: w1 / w2 are (tap, cin, cout) (PyTorch conv1d weight
    (cout, cin, k) transposed per tap); w1x1 is (cin, cout); biases (1, C).
    """
    C = p["w1"].shape[1]
    w1_cat = p["w1"].reshape(3 * C, C).astype(compute_dtype)

    w2 = p["w2"]
    # 4 taps multiply [o1[2m-1], o1[2m], o1[2m+1], o1[2m+2]] (0.5 pool factor folded in).
    w4 = jnp.stack([0.5 * w2[0],
                    0.5 * (w2[0] + w2[1]),
                    0.5 * (w2[1] + w2[2]),
                    0.5 * w2[2]], axis=0)                        # (4, C, C)
    b4 = p["b2"]
    if use_conv1x1:
        w4 = w4.at[1].add(0.5 * p["w1x1"])
        w4 = w4.at[2].add(0.5 * p["w1x1"])
        b4 = b4 + p["b1x1"]
    w4_cat = w4.reshape(4 * C, C).astype(compute_dtype)
    return w1_cat, p["b1"].astype(jnp.float32), w4_cat, b4.astype(jnp.float32)


def _pick_batch_block(B, L, target_rows=256):
    """Choose batch rows per grid step so each dot has M >= ~256 rows (v6e/v7x MXU)."""
    bb = max(1, min(B, target_rows // max(L, 1)))
    while B % bb:
        bb -= 1
    return bb


def downsampling(x, x2, params, *, batch_block=None):
    """DownSampling.forward(x, x2); x is (B, L, C) channels-last, x2 only gates conv1x1."""
    B, L, C = x.shape
    assert L % 2 == 0, "AvgPool1d(2) needs an even sequence length"
    w1c, b1, w4c, b4 = fold_params(params, use_conv1x1=x2 is not None)
    bb = _pick_batch_block(B, L) if batch_block is None else batch_block
    assert B % bb == 0

    # NOTE: for production-length L, add an L-tile grid axis with a 2-row halo
    # (manual DMA from a pl.ANY-space x) and set vmem_limit_bytes explicitly;
    # at demo shapes the whole-L block is a few hundred KiB, far under VMEM.
    out1, out2 = pl.pallas_call(
        downsampling_kernel,
        out_shape=(jax.ShapeDtypeStruct((B, L, C), x.dtype),
                   jax.ShapeDtypeStruct((B, L // 2, C), x.dtype)),
        grid=(B // bb,),
        in_specs=[
            pl.BlockSpec((bb, L, C), lambda i: (i, 0, 0)),       # x
            pl.BlockSpec((3 * C, C), lambda i: (0, 0)),          # w1 (stacked taps, bf16)
            pl.BlockSpec((1, C), lambda i: (0, 0)),              # b1 (f32)
            pl.BlockSpec((4 * C, C), lambda i: (0, 0)),          # w4 (conv2+1x1+pool, bf16)
            pl.BlockSpec((1, C), lambda i: (0, 0)),              # b4 (f32)
        ],
        out_specs=(pl.BlockSpec((bb, L, C), lambda i: (i, 0, 0)),
                   pl.BlockSpec((bb, L // 2, C), lambda i: (i, 0, 0))),
        compiler_params=pltpu.CompilerParams(
            dimension_semantics=("parallel",)),                  # batch blocks -> both TCs on v7x
    )(x, w1c, b1, w4c, b4)
    return out1, out2


# --------------------------------------------------------------- params / reference


def init_params(key, c):
    ks = jax.random.split(key, 6)
    s3 = (3.0 * c) ** -0.5
    s1 = (1.0 * c) ** -0.5
    return {
        "w1": jax.random.normal(ks[0], (3, c, c), jnp.float32) * s3,   # (tap, cin, cout)
        "b1": jax.random.normal(ks[1], (1, c), jnp.float32) * s3,
        "w2": jax.random.normal(ks[2], (3, c, c), jnp.float32) * s3,
        "b2": jax.random.normal(ks[3], (1, c), jnp.float32) * s3,
        "w1x1": jax.random.normal(ks[4], (c, c), jnp.float32) * s1,    # (cin, cout)
        "b1x1": jax.random.normal(ks[5], (1, c), jnp.float32) * s1,
    }


def _conv3_ref(x, w, b):
    hi = lax.Precision.HIGHEST
    xp = jnp.pad(x, ((0, 0), (1, 1), (0, 0)))
    return (jnp.einsum("blc,cd->bld", xp[:, :-2], w[0], precision=hi)
            + jnp.einsum("blc,cd->bld", xp[:, 1:-1], w[1], precision=hi)
            + jnp.einsum("blc,cd->bld", xp[:, 2:], w[2], precision=hi)
            + b)


def downsampling_ref(x, x2, p):
    hi = lax.Precision.HIGHEST
    out1 = _conv3_ref(x, p["w1"], p["b1"])
    out2 = _conv3_ref(out1, p["w2"], p["b2"])
    if x2 is not None:
        out2 = out2 + jnp.einsum("blc,cd->bld", out1, p["w1x1"], precision=hi) + p["b1x1"]
    pooled = 0.5 * (out2[:, 0::2] + out2[:, 1::2])
    return out1, jax.nn.relu(pooled)


# ------------------------------------------------------------------------- main


if __name__ == "__main__":
    B, L, C = 2, 64, 128      # batch, sequence length (even), channels (lane-dense)
    root = jax.random.PRNGKey(0)
    kp, kx, kx2 = jax.random.split(root, 3)
    params = init_params(kp, C)
    x = jax.random.normal(kx, (B, L, C), jnp.float32)
    x2 = jax.random.normal(kx2, (B, L, C), jnp.float32)   # values unused; acts as a flag

    fwd = jax.jit(downsampling)

    # Branch without conv1x1 (x2 is None) and with conv1x1 (x2 is not None).
    o1a, o2a = jax.block_until_ready(fwd(x, None, params))
    o1b, o2b = jax.block_until_ready(fwd(x, x2, params))

    assert o1a.shape == (B, L, C) and o2a.shape == (B, L // 2, C)
    assert o1b.shape == (B, L, C) and o2b.shape == (B, L // 2, C)

    r1a, r2a = downsampling_ref(x, None, params)
    r1b, r2b = downsampling_ref(x, x2, params)
    # Tolerance reflects bf16 MXU operands (f32 accumulation); values are O(1).
    TOL = 5e-2
    for got, ref in ((o1a, r1a), (o2a, r2a), (o1b, r1b), (o2b, r2b)):
        assert jnp.all(jnp.isfinite(got))
        err = float(jnp.max(jnp.abs(got - ref)))
        assert err < TOL, f"mismatch vs reference: max abs err {err}"

    print("KERNEL_OK")
</pallas_src>

<mosaic_0001>
module attributes {stable_mosaic.version = 11 : i64} {
  func.func @downsampling_kernel(%arg0: i32, %arg1: memref<2x64x128xf32, #tpu.memory_space<vmem>>, %arg2: memref<384x128xbf16, #tpu.memory_space<vmem>>, %arg3: memref<1x128xf32, #tpu.memory_space<vmem>>, %arg4: memref<512x128xbf16, #tpu.memory_space<vmem>>, %arg5: memref<1x128xf32, #tpu.memory_space<vmem>>, %arg6: memref<2x64x128xf32, #tpu.memory_space<vmem>>, %arg7: memref<2x32x128xf32, #tpu.memory_space<vmem>>) attributes {dimension_semantics = [#tpu.dimension_semantics<parallel>], iteration_bounds = array<i64: 1>, scalar_prefetch = 0 : i64, scratch_operands = 0 : i64, tpu.core_type = #tpu.core_type<tc>, window_params = [{transform_indices = @transform_0, window_bounds = array<i64: 2, 64, 128>}, {pipeline_mode = #tpu.pipeline_mode<synchronous>, transform_indices = @transform_1, window_bounds = array<i64: 384, 128>}, {pipeline_mode = #tpu.pipeline_mode<synchronous>, transform_indices = @transform_2, window_bounds = array<i64: 1, 128>}, {pipeline_mode = #tpu.pipeline_mode<synchronous>, transform_indices = @transform_3, window_bounds = array<i64: 512, 128>}, {pipeline_mode = #tpu.pipeline_mode<synchronous>, transform_indices = @transform_4, window_bounds = array<i64: 1, 128>}, {transform_indices = @transform_5, window_bounds = array<i64: 2, 64, 128>}, {transform_indices = @transform_6, window_bounds = array<i64: 2, 32, 128>}]} {
    %c0 = arith.constant 0 : index
    %c0_0 = arith.constant 0 : index
    %c0_1 = arith.constant 0 : index
    %0 = vector.load %arg1[%c0, %c0_0, %c0_1] : memref<2x64x128xf32, #tpu.memory_space<vmem>>, vector<2x64x128xf32>
    %1 = vector.shape_cast %0 : vector<2x64x128xf32> to vector<128x128xf32>
    %2 = tpu.iota {dimensions = array<i32: 0>} : vector<128x1xi32>
    %c64_i32 = arith.constant 64 : i32
    %c0_i32 = arith.constant 0 : i32
    %3 = arith.cmpi eq, %c64_i32, %c0_i32 : i32
    %c1_i32 = arith.constant 1 : i32
    %4 = arith.select %3, %c1_i32, %c64_i32 : i32
    %5 = vector.broadcast %4 : i32 to vector<128x1xi32>
    %6 = arith.remsi %2, %5 : vector<128x1xi32>
    %c0_i32_2 = arith.constant 0 : i32
    %7 = vector.broadcast %c0_i32_2 : i32 to vector<128x1xi32>
    %8 = arith.cmpi ne, %6, %7 : vector<128x1xi32>
    %c0_i32_3 = arith.constant 0 : i32
    %9 = vector.broadcast %c0_i32_3 : i32 to vector<128x1xi32>
    %10 = arith.cmpi slt, %6, %9 : vector<128x1xi32>
    %c0_i32_4 = arith.constant 0 : i32
    %11 = arith.cmpi slt, %4, %c0_i32_4 : i32
    %12 = vector.broadcast %11 : i1 to vector<128x1xi1>
    %13 = vector.broadcast %12 : vector<128x1xi1> to vector<128x1xi1>
    %14 = arith.xori %10, %13 : vector<128x1xi1>
    %15 = arith.andi %14, %8 : vector<128x1xi1>
    %16 = vector.broadcast %4 : i32 to vector<128x1xi32>
    %17 = arith.addi %6, %16 : vector<128x1xi32>
    %18 = arith.select %15, %17, %6 : vector<128x1xi1>, vector<128x1xi32>
    %c1_i32_5 = arith.constant 1 : i32
    %19 = vector.broadcast %c1_i32_5 : i32 to vector<128x1xi32>
    %20 = arith.cmpi sge, %18, %19 : vector<128x1xi32>
    %c1_i32_6 = arith.constant 1 : i32
    %21 = tpu.dynamic_rotate %1 by %c1_i32_6 dim 0 : vector<128x128xf32>, i32 -> vector<128x128xf32>
    %cst = arith.constant 0.000000e+00 : f32
    %22 = vector.shape_cast %20 : vector<128x1xi1> to vector<128x1xi1>
    %23 = vector.broadcast %22 : vector<128x1xi1> to vector<128x128xi1>
    %24 = vector.broadcast %cst : f32 to vector<128x128xf32>
    %25 = arith.select %23, %21, %24 : vector<128x128xi1>, vector<128x128xf32>
    %c62_i32 = arith.constant 62 : i32
    %26 = vector.broadcast %c62_i32 : i32 to vector<128x1xi32>
    %27 = arith.cmpi sle, %18, %26 : vector<128x1xi32>
    %c127_i32 = arith.constant 127 : i32
    %28 = tpu.dynamic_rotate %1 by %c127_i32 dim 0 : vector<128x128xf32>, i32 -> vector<128x128xf32>
    %cst_7 = arith.constant 0.000000e+00 : f32
    %29 = vector.shape_cast %27 : vector<128x1xi1> to vector<128x1xi1>
    %30 = vector.broadcast %29 : vector<128x1xi1> to vector<128x128xi1>
    %31 = vector.broadcast %cst_7 : f32 to vector<128x128xf32>
    %32 = arith.select %30, %28, %31 : vector<128x128xi1>, vector<128x128xf32>
    %33 = tpu.concatenate %25, %1, %32 in 1 : vector<128x128xf32>, vector<128x128xf32>, vector<128x128xf32> -> vector<128x384xf32>
    %34 = arith.truncf %33 : vector<128x384xf32> to vector<128x384xbf16>
    %c0_8 = arith.constant 0 : index
    %c0_9 = arith.constant 0 : index
    %35 = vector.load %arg2[%c0_8, %c0_9] : memref<384x128xbf16, #tpu.memory_space<vmem>>, vector<384x128xbf16>
    %cst_10 = arith.constant dense<0.000000e+00> : vector<128x128xf32>
    %36 = tpu.matmul %34, %35, %cst_10 {dimension_numbers = #tpu.dot_dimension_numbers<[1], [0], [0], [1], [0, 0, 1, 1], [], []>} : vector<128x384xbf16>, vector<384x128xbf16>, vector<128x128xf32> -> vector<128x128xf32>
    %c0_11 = arith.constant 0 : index
    %c0_12 = arith.constant 0 : index
    %37 = vector.load %arg3[%c0_11, %c0_12] : memref<1x128xf32, #tpu.memory_space<vmem>>, vector<1x128xf32>
    %38 = vector.broadcast %37 : vector<1x128xf32> to vector<128x128xf32>
    %39 = arith.addf %36, %38 : vector<128x128xf32>
    %40 = vector.shape_cast %39 : vector<128x128xf32> to vector<2x64x128xf32>
    %c0_13 = arith.constant 0 : index
    %c0_14 = arith.constant 0 : index
    %c0_15 = arith.constant 0 : index
    %41 = vector.load %arg6[%c0_13, %c0_14, %c0_15] : memref<2x64x128xf32, #tpu.memory_space<vmem>>, vector<2x64x128xf32>
    tpu.vector_store %arg6[%c0_13, %c0_14, %c0_15], %40 {strides = array<i32>} : memref<2x64x128xf32, #tpu.memory_space<vmem>>, vector<2x64x128xf32>,
    %42 = vector.shape_cast %39 : vector<128x128xf32> to vector<64x256xf32>
    %43 = vector.extract_strided_slice %42 {offsets = [0, 0], sizes = [64, 128], strides = [1, 1]} : vector<64x256xf32> to vector<64x128xf32>
    %44 = vector.extract_strided_slice %42 {offsets = [0, 128], sizes = [64, 128], strides = [1, 1]} : vector<64x256xf32> to vector<64x128xf32>
    %45 = tpu.iota {dimensions = array<i32: 0>} : vector<64x1xi32>
    %c32_i32 = arith.constant 32 : i32
    %c0_i32_16 = arith.constant 0 : i32
    %46 = arith.cmpi eq, %c32_i32, %c0_i32_16 : i32
    %c1_i32_17 = arith.constant 1 : i32
    %47 = arith.select %46, %c1_i32_17, %c32_i32 : i32
    %48 = vector.broadcast %47 : i32 to vector<64x1xi32>
    %49 = arith.remsi %45, %48 : vector<64x1xi32>
    %c0_i32_18 = arith.constant 0 : i32
    %50 = vector.broadcast %c0_i32_18 : i32 to vector<64x1xi32>
    %51 = arith.cmpi ne, %49, %50 : vector<64x1xi32>
    %c0_i32_19 = arith.constant 0 : i32
    %52 = vector.broadcast %c0_i32_19 : i32 to vector<64x1xi32>
    %53 = arith.cmpi slt, %49, %52 : vector<64x1xi32>
    %c0_i32_20 = arith.constant 0 : i32
    %54 = arith.cmpi slt, %47, %c0_i32_20 : i32
    %55 = vector.broadcast %54 : i1 to vector<64x1xi1>
    %56 = vector.broadcast %55 : vector<64x1xi1> to vector<64x1xi1>
    %57 = arith.xori %53, %56 : vector<64x1xi1>
    %58 = arith.andi %57, %51 : vector<64x1xi1>
    %59 = vector.broadcast %47 : i32 to vector<64x1xi32>
    %60 = arith.addi %49, %59 : vector<64x1xi32>
    %61 = arith.select %58, %60, %49 : vector<64x1xi1>, vector<64x1xi32>
    %c1_i32_21 = arith.constant 1 : i32
    %62 = vector.broadcast %c1_i32_21 : i32 to vector<64x1xi32>
    %63 = arith.cmpi sge, %61, %62 : vector<64x1xi32>
    %c1_i32_22 = arith.constant 1 : i32
    %64 = tpu.dynamic_rotate %44 by %c1_i32_22 dim 0 : vector<64x128xf32>, i32 -> vector<64x128xf32>
    %cst_23 = arith.constant 0.000000e+00 : f32
    %65 = vector.shape_cast %63 : vector<64x1xi1> to vector<64x1xi1>
    %66 = vector.broadcast %65 : vector<64x1xi1> to vector<64x128xi1>
    %67 = vector.broadcast %cst_23 : f32 to vector<64x128xf32>
    %68 = arith.select %66, %64, %67 : vector<64x128xi1>, vector<64x128xf32>
    %c30_i32 = arith.constant 30 : i32
    %69 = vector.broadcast %c30_i32 : i32 to vector<64x1xi32>
    %70 = arith.cmpi sle, %61, %69 : vector<64x1xi32>
    %c63_i32 = arith.constant 63 : i32
    %71 = tpu.dynamic_rotate %43 by %c63_i32 dim 0 : vector<64x128xf32>, i32 -> vector<64x128xf32>
    %cst_24 = arith.constant 0.000000e+00 : f32
    %72 = vector.shape_cast %70 : vector<64x1xi1> to vector<64x1xi1>
    %73 = vector.broadcast %72 : vector<64x1xi1> to vector<64x128xi1>
    %74 = vector.broadcast %cst_24 : f32 to vector<64x128xf32>
    %75 = arith.select %73, %71, %74 : vector<64x128xi1>, vector<64x128xf32>
    %76 = tpu.concatenate %68, %43, %44, %75 in 1 : vector<64x128xf32>, vector<64x128xf32>, vector<64x128xf32>, vector<64x128xf32> -> vector<64x512xf32>
    %77 = arith.truncf %76 : vector<64x512xf32> to vector<64x512xbf16>
    %c0_25 = arith.constant 0 : index
    %c0_26 = arith.constant 0 : index
    %78 = vector.load %arg4[%c0_25, %c0_26] : memref<512x128xbf16, #tpu.memory_space<vmem>>, vector<512x128xbf16>
    %cst_27 = arith.constant dense<0.000000e+00> : vector<64x128xf32>
    %79 = tpu.matmul %77, %78, %cst_27 {dimension_numbers = #tpu.dot_dimension_numbers<[1], [0], [0], [1], [0, 0, 1, 1], [], []>} : vector<64x512xbf16>, vector<512x128xbf16>, vector<64x128xf32> -> vector<64x128xf32>
    %c0_28 = arith.constant 0 : index
    %c0_29 = arith.constant 0 : index
    %80 = vector.load %arg5[%c0_28, %c0_29] : memref<1x128xf32, #tpu.memory_space<vmem>>, vector<1x128xf32>
    %81 = vector.broadcast %80 : vector<1x128xf32> to vector<64x128xf32>
    %82 = arith.addf %79, %81 : vector<64x128xf32>
    %cst_30 = arith.constant 0.000000e+00 : f32
    %83 = vector.broadcast %cst_30 : f32 to vector<64x128xf32>
    %84 = arith.maximumf %82, %83 : vector<64x128xf32>
    %85 = vector.shape_cast %84 : vector<64x128xf32> to vector<2x32x128xf32>
    %c0_31 = arith.constant 0 : index
    %c0_32 = arith.constant 0 : index
    %c0_33 = arith.constant 0 : index
    %86 = vector.load %arg7[%c0_31, %c0_32, %c0_33] : memref<2x32x128xf32, #tpu.memory_space<vmem>>, vector<2x32x128xf32>
    tpu.vector_store %arg7[%c0_31, %c0_32, %c0_33], %85 {strides = array<i32>} : memref<2x32x128xf32, #tpu.memory_space<vmem>>, vector<2x32x128xf32>,
    return
  }
  func.func @transform_0(%arg0: i32) -> (i32, i32, i32) {
    %c0_i32 = arith.constant 0 : i32
    %c0_i32_0 = arith.constant 0 : i32
    %c0_i32_1 = arith.constant 0 : i32
    return %arg0, %c0_i32, %c0_i32_0 : i32, i32, i32
  }
  func.func @transform_1(%arg0: i32) -> (i32, i32) {
    %c0_i32 = arith.constant 0 : i32
    %c0_i32_0 = arith.constant 0 : i32
    %c0_i32_1 = arith.constant 0 : i32
    return %c0_i32, %c0_i32_0 : i32, i32
  }
  func.func @transform_2(%arg0: i32) -> (i32, i32) {
    %c0_i32 = arith.constant 0 : i32
    %c0_i32_0 = arith.constant 0 : i32
    %c0_i32_1 = arith.constant 0 : i32
    return %c0_i32, %c0_i32_0 : i32, i32
  }
  func.func @transform_3(%arg0: i32) -> (i32, i32) {
    %c0_i32 = arith.constant 0 : i32
    %c0_i32_0 = arith.constant 0 : i32
    %c0_i32_1 = arith.constant 0 : i32
    return %c0_i32, %c0_i32_0 : i32, i32
  }
  func.func @transform_4(%arg0: i32) -> (i32, i32) {
    %c0_i32 = arith.constant 0 : i32
    %c0_i32_0 = arith.constant 0 : i32
    %c0_i32_1 = arith.constant 0 : i32
    return %c0_i32, %c0_i32_0 : i32, i32
  }
  func.func @transform_5(%arg0: i32) -> (i32, i32, i32) {
    %c0_i32 = arith.constant 0 : i32
    %c0_i32_0 = arith.constant 0 : i32
    %c0_i32_1 = arith.constant 0 : i32
    return %arg0, %c0_i32, %c0_i32_0 : i32, i32, i32
  }
  func.func @transform_6(%arg0: i32) -> (i32, i32, i32) {
    %c0_i32 = arith.constant 0 : i32
    %c0_i32_0 = arith.constant 0 : i32
    %c0_i32_1 = arith.constant 0 : i32
    return %arg0, %c0_i32, %c0_i32_0 : i32, i32, i32
  }
}

</mosaic_0001>

<llo_original>
// kernel: downsampling.1
$region0: #{downsampling.1}
  #allocation0 [shape = 'u32[]', space=smem, size = 0x4, offset = 0x4, fixed_abs, tag = 'smem constant byte address 0x4 - core index']
  #allocation1 [shape = 'u32[144,128]{1,0:T(1,128)}', space=vmem, size = 0x12000, scoped, tag = 'internal scratch']
  %s0 = inlined_call_operand.vmem [shape: f32[2,64,128], index: 0, kind: input, shape index: {}]
  %s1 = inlined_call_operand.vmem [shape: bf16[384,128], index: 1, kind: input, shape index: {}]
  %s2 = inlined_call_operand.vmem [shape: f32[1,128], index: 2, kind: input, shape index: {}]
  %s3 = inlined_call_operand.vmem [shape: bf16[512,128], index: 3, kind: input, shape index: {}]
  %s4 = inlined_call_operand.vmem [shape: f32[1,128], index: 4, kind: input, shape index: {}]
  %s5 = inlined_call_operand.hbm [shape: f32[2,64,128], index: 5, kind: output, shape index: {0}]
  %s6 = inlined_call_operand.hbm [shape: f32[2,32,128], index: 6, kind: output, shape index: {1}]
  %7 = xla_tuple %s5, %s6
  %s8 = sld [smem:[#allocation0]]
  $region38: #{downsampling.1} parent=0
    _
  %s10 = ssub.s32 1, %s8
  %s11 = scalar_select 0, %s10, %s8
  $region1: #{downsampling.1} parent=0
    #allocation2 [shape = 'u8[65536]{0}', space=vmem, size = 0x10000, scoped, tag = 'output window, operand 0, single buffered']
    #allocation3 [shape = 's32[1]{0}', space=sflag, size = 0x4, scoped, tag = 'scoped memory for downsampling.1']
    #allocation4 [shape = 'u8[32768]{0}', space=vmem, size = 0x8000, scoped, tag = 'output window, operand 1, single buffered']
    #allocation5 [shape = 's32[1]{0}', space=sflag, size = 0x4, scoped, tag = 'scoped memory for downsampling.1']
    %12 = vsyncpa [#allocation3], 0
    %13 = vsyncpa [#allocation5], 0
    // Predicated region
    $region2: #{downsampling.1} parent=1 // pred_check
      _
    $region3: #{downsampling.1} parent=1 // pred_check_branch
      %15 = sbr.rel (0) target = $region5
    $region4: #{downsampling.1} parent=1 // pred_region
      _
    $region5: #{downsampling.1} parent=1 // pred_fallthru
      _
    // Predicated region
    $region6: #{downsampling.1} parent=1 // pred_check
      _
    $region7: #{downsampling.1} parent=1 // pred_check_branch
      %17 = sbr.rel (0) target = $region9
    $region8: #{downsampling.1} parent=1 // pred_region
      _
    $region9: #{downsampling.1} parent=1 // pred_fallthru
      _
    // Predicated region
    $region10: #{downsampling.1} parent=1 // pred_check
      _
    $region11: #{downsampling.1} parent=1 // pred_check_branch
      %19 = sbr.rel (0) target = $region13
    $region12: #{downsampling.1} parent=1 // pred_region
      _
    $region13: #{downsampling.1} parent=1 // pred_fallthru
      _
    // Predicated region
    $region14: #{downsampling.1} parent=1 // pred_check
      _
    $region15: #{downsampling.1} parent=1 // pred_check_branch
      %21 = sbr.rel (0) target = $region17
    $region16: #{downsampling.1} parent=1 // pred_region
      _
    $region17: #{downsampling.1} parent=1 // pred_fallthru
      _
    // Predicated region
    $region18: #{downsampling.1} parent=1 // pred_check
      _
    $region19: #{downsampling.1} parent=1 // pred_check_branch
      %23 = sbr.rel (0) target = $region21
    $region20: #{downsampling.1} parent=1 // pred_region
      _
    $region21: #{downsampling.1} parent=1 // pred_fallthru
      _
    %v25 = vld [vmem:[%s0] sm:$0xff]
    %v26 = vld [vmem:[%s0 + $0x8] sm:$0xff]
    %v27 = vld [vmem:[%s0 + $0x10] sm:$0xff]
    %v28 = vld [vmem:[%s0 + $0x18] sm:$0xff]
    %v29 = vld [vmem:[%s0 + $0x20] sm:$0xff]
    %v30 = vld [vmem:[%s0 + $0x28] sm:$0xff]
    %v31 = vld [vmem:[%s0 + $0x30] sm:$0xff]
    %v32 = vld [vmem:[%s0 + $0x38] sm:$0xff]
    %v33 = vld [vmem:[%s0 + $0x40] sm:$0xff]
    %v34 = vld [vmem:[%s0 + $0x48] sm:$0xff]
    %v35 = vld [vmem:[%s0 + $0x50] sm:$0xff]
    %v36 = vld [vmem:[%s0 + $0x58] sm:$0xff]
    %v37 = vld [vmem:[%s0 + $0x60] sm:$0xff]
    %v38 = vld [vmem:[%s0 + $0x68] sm:$0xff]
    %v39 = vld [vmem:[%s0 + $0x70] sm:$0xff]
    %v40 = vld [vmem:[%s0 + $0x78] sm:$0xff]
    %v41 = vlaneseq
    %v42 = vshrl.u32 %v41, 7
    %v43 = vadd.s32 %v42, 8
    %v44 = vadd.s32 %v42, 16
    %v45 = vadd.s32 %v42, 24
    %v46 = vadd.s32 %v42, 32
    %v47 = vadd.s32 %v42, 40
    %v48 = vadd.s32 %v42, 48
    %v49 = vadd.s32 %v42, 56
    %v50 = vadd.s32 %v42, 64
    %v51 = vadd.s32 %v42, 72
    %v52 = vadd.s32 %v42, 80
    %v53 = vadd.s32 %v42, 88
    %v54 = vadd.s32 %v42, 96
    %v55 = vadd.s32 %v42, 104
    %v56 = vadd.s32 %v42, 112
    %v57 = vadd.s32 %v42, 120
    %vm58 = vcmp.lt.s32.totalorder %v42, 0
    %v59 = vsub.s32 0, %v42
    %v60 = vsel %vm58, %v59, %v42
    %v61 = vshrl.u32 %v60, 6
    %v62 = vand.u32 %v60, 63
    %v63 = vsub.s32 0, %v62
    %v64 = vsel %vm58, %v63, %v62
    %vm65 = vcmp.lt.s32.totalorder %v43, 0
    %v66 = vsub.s32 0, %v43
    %v67 = vsel %vm65, %v66, %v43
    %v68 = vshrl.u32 %v67, 6
    %v69 = vand.u32 %v67, 63
    %v70 = vsub.s32 0, %v69
    %v71 = vsel %vm65, %v70, %v69
    %vm72 = vcmp.lt.s32.totalorder %v44, 0
    %v73 = vsub.s32 0, %v44
    %v74 = vsel %vm72, %v73, %v44
    %v75 = vshrl.u32 %v74, 6
    %v76 = vand.u32 %v74, 63
    %v77 = vsub.s32 0, %v76
    %v78 = vsel %vm72, %v77, %v76
    %vm79 = vcmp.lt.s32.totalorder %v45, 0
    %v80 = vsub.s32 0, %v45
    %v81 = vsel %vm79, %v80, %v45
    %v82 = vshrl.u32 %v81, 6
    %v83 = vand.u32 %v81, 63
    %v84 = vsub.s32 0, %v83
    %v85 = vsel %vm79, %v84, %v83
    %vm86 = vcmp.lt.s32.totalorder %v46, 0
    %v87 = vsub.s32 0, %v46
    %v88 = vsel %vm86, %v87, %v46
    %v89 = vshrl.u32 %v88, 6
    %v90 = vand.u32 %v88, 63
    %v91 = vsub.s32 0, %v90
    %v92 = vsel %vm86, %v91, %v90
    %vm93 = vcmp.lt.s32.totalorder %v47, 0
    %v94 = vsub.s32 0, %v47
    %v95 = vsel %vm93, %v94, %v47
    %v96 = vshrl.u32 %v95, 6
    %v97 = vand.u32 %v95, 63
    %v98 = vsub.s32 0, %v97
    %v99 = vsel %vm93, %v98, %v97
    %vm100 = vcmp.lt.s32.totalorder %v48, 0
    %v101 = vsub.s32 0, %v48
    %v102 = vsel %vm100, %v101, %v48
    %v103 = vshrl.u32 %v102, 6
    %v104 = vand.u32 %v102, 63
    %v105 = vsub.s32 0, %v104
    %v106 = vsel %vm100, %v105, %v104
    %vm107 = vcmp.lt.s32.totalorder %v49, 0
    %v108 = vsub.s32 0, %v49
    %v109 = vsel %vm107, %v108, %v49
    %v110 = vshrl.u32 %v109, 6
    %v111 = vand.u32 %v109, 63
    %v112 = vsub.s32 0, %v111
    %v113 = vsel %vm107, %v112, %v111
    %vm114 = vcmp.lt.s32.totalorder %v50, 0
    %v115 = vsub.s32 0, %v50
    %v116 = vsel %vm114, %v115, %v50
    %v117 = vshrl.u32 %v116, 6
    %v118 = vand.u32 %v116, 63
    %v119 = vsub.s32 0, %v118
    %v120 = vsel %vm114, %v119, %v118
    %vm121 = vcmp.lt.s32.totalorder %v51, 0
    %v122 = vsub.s32 0, %v51
    %v123 = vsel %vm121, %v122, %v51
    %v124 = vshrl.u32 %v123, 6
    %v125 = vand.u32 %v123, 63
    %v126 = vsub.s32 0, %v125
    %v127 = vsel %vm121, %v126, %v125
    %vm128 = vcmp.lt.s32.totalorder %v52, 0
    %v129 = vsub.s32 0, %v52
    %v130 = vsel %vm128, %v129, %v52
    %v131 = vshrl.u32 %v130, 6
    %v132 = vand.u32 %v130, 63
    %v133 = vsub.s32 0, %v132
    %v134 = vsel %vm128, %v133, %v132
    %vm135 = vcmp.lt.s32.totalorder %v53, 0
    %v136 = vsub.s32 0, %v53
    %v137 = vsel %vm135, %v136, %v53
    %v138 = vshrl.u32 %v137, 6
    %v139 = vand.u32 %v137, 63
    %v140 = vsub.s32 0, %v139
    %v141 = vsel %vm135, %v140, %v139
    %vm142 = vcmp.lt.s32.totalorder %v54, 0
    %v143 = vsub.s32 0, %v54
    %v144 = vsel %vm142, %v143, %v54
    %v145 = vshrl.u32 %v144, 6
    %v146 = vand.u32 %v144, 63
    %v147 = vsub.s32 0, %v146
    %v148 = vsel %vm142, %v147, %v146
    %vm149 = vcmp.lt.s32.totalorder %v55, 0
    %v150 = vsub.s32 0, %v55
    %v151 = vsel %vm149, %v150, %v55
    %v152 = vshrl.u32 %v151, 6
    %v153 = vand.u32 %v151, 63
    %v154 = vsub.s32 0, %v153
    %v155 = vsel %vm149, %v154, %v153
    %vm156 = vcmp.lt.s32.totalorder %v56, 0
    %v157 = vsub.s32 0, %v56
    %v158 = vsel %vm156, %v157, %v56
    %v159 = vshrl.u32 %v158, 6
    %v160 = vand.u32 %v158, 63
    %v161 = vsub.s32 0, %v160
    %v162 = vsel %vm156, %v161, %v160
    %vm163 = vcmp.lt.s32.totalorder %v57, 0
    %v164 = vsub.s32 0, %v57
    %v165 = vsel %vm163, %v164, %v57
    %v166 = vshrl.u32 %v165, 6
    %v167 = vand.u32 %v165, 63
    %v168 = vsub.s32 0, %v167
    %v169 = vsel %vm163, %v168, %v167
    %vm170 = vcmp.ne.s32.totalorder %v64, 0
    %vm171 = vcmp.ne.s32.totalorder %v71, 0
    %vm172 = vcmp.ne.s32.totalorder %v78, 0
    %vm173 = vcmp.ne.s32.totalorder %v85, 0
    %vm174 = vcmp.ne.s32.totalorder %v92, 0
    %vm175 = vcmp.ne.s32.totalorder %v99, 0
    %vm176 = vcmp.ne.s32.totalorder %v106, 0
    %vm177 = vcmp.ne.s32.totalorder %v113, 0
    %vm178 = vcmp.ne.s32.totalorder %v120, 0
    %vm179 = vcmp.ne.s32.totalorder %v127, 0
    %vm180 = vcmp.ne.s32.totalorder %v134, 0
    %vm181 = vcmp.ne.s32.totalorder %v141, 0
    %vm182 = vcmp.ne.s32.totalorder %v148, 0
    %vm183 = vcmp.ne.s32.totalorder %v155, 0
    %vm184 = vcmp.ne.s32.totalorder %v162, 0
    %vm185 = vcmp.ne.s32.totalorder %v169, 0
    %vm186 = vcmp.lt.s32.totalorder %v64, 0
    %vm187 = vcmp.lt.s32.totalorder %v71, 0
    %vm188 = vcmp.lt.s32.totalorder %v78, 0
    %vm189 = vcmp.lt.s32.totalorder %v85, 0
    %vm190 = vcmp.lt.s32.totalorder %v92, 0
    %vm191 = vcmp.lt.s32.totalorder %v99, 0
    %vm192 = vcmp.lt.s32.totalorder %v106, 0
    %vm193 = vcmp.lt.s32.totalorder %v113, 0
    %vm194 = vcmp.lt.s32.totalorder %v120, 0
    %vm195 = vcmp.lt.s32.totalorder %v127, 0
    %vm196 = vcmp.lt.s32.totalorder %v134, 0
    %vm197 = vcmp.lt.s32.totalorder %v141, 0
    %vm198 = vcmp.lt.s32.totalorder %v148, 0
    %vm199 = vcmp.lt.s32.totalorder %v155, 0
    %vm200 = vcmp.lt.s32.totalorder %v162, 0
    %vm201 = vcmp.lt.s32.totalorder %v169, 0
    %vm202 = vmand %vm186, %vm170
    %vm203 = vmand %vm187, %vm171
    %vm204 = vmand %vm188, %vm172
    %vm205 = vmand %vm189, %vm173
    %vm206 = vmand %vm190, %vm174
    %vm207 = vmand %vm191, %vm175
    %vm208 = vmand %vm192, %vm176
    %vm209 = vmand %vm193, %vm177
    %vm210 = vmand %vm194, %vm178
    %vm211 = vmand %vm195, %vm179
    %vm212 = vmand %vm196, %vm180
    %vm213 = vmand %vm197, %vm181
    %vm214 = vmand %vm198, %vm182
    %vm215 = vmand %vm199, %vm183
    %vm216 = vmand %vm200, %vm184
    %vm217 = vmand %vm201, %vm185
    %v218 = vadd.s32 %v64, 64
    %v219 = vadd.s32 %v71, 64
    %v220 = vadd.s32 %v78, 64
    %v221 = vadd.s32 %v85, 64
    %v222 = vadd.s32 %v92, 64
    %v223 = vadd.s32 %v99, 64
    %v224 = vadd.s32 %v106, 64
    %v225 = vadd.s32 %v113, 64
    %v226 = vadd.s32 %v120, 64
    %v227 = vadd.s32 %v127, 64
    %v228 = vadd.s32 %v134, 64
    %v229 = vadd.s32 %v141, 64
    %v230 = vadd.s32 %v148, 64
    %v231 = vadd.s32 %v155, 64
    %v232 = vadd.s32 %v162, 64
    %v233 = vadd.s32 %v169, 64
    %v234 = vsel %vm202, %v218, %v64
    %v235 = vsel %vm203, %v219, %v71
    %v236 = vsel %vm204, %v220, %v78
    %v237 = vsel %vm205, %v221, %v85
    %v238 = vsel %vm206, %v222, %v92
    %v239 = vsel %vm207, %v223, %v99
    %v240 = vsel %vm208, %v224, %v106
    %v241 = vsel %vm209, %v225, %v113
    %v242 = vsel %vm210, %v226, %v120
    %v243 = vsel %vm211, %v227, %v127
    %v244 = vsel %vm212, %v228, %v134
    %v245 = vsel %vm213, %v229, %v141
    %v246 = vsel %vm214, %v230, %v148
    %v247 = vsel %vm215, %v231, %v155
    %v248 = vsel %vm216, %v232, %v162
    %v249 = vsel %vm217, %v233, %v169
    %vm250 = vcmp.ge.s32.totalorder %v234, 1
    %vm251 = vcmp.ge.s32.totalorder %v235, 1
    %vm252 = vcmp.ge.s32.totalorder %v236, 1
    %vm253 = vcmp.ge.s32.totalorder %v237, 1
    %vm254 = vcmp.ge.s32.totalorder %v238, 1
    %vm255 = vcmp.ge.s32.totalorder %v239, 1
    %vm256 = vcmp.ge.s32.totalorder %v240, 1
    %vm257 = vcmp.ge.s32.totalorder %v241, 1
    %vm258 = vcmp.ge.s32.totalorder %v242, 1
    %vm259 = vcmp.ge.s32.totalorder %v243, 1
    %vm260 = vcmp.ge.s32.totalorder %v244, 1
    %vm261 = vcmp.ge.s32.totalorder %v245, 1
    %vm262 = vcmp.ge.s32.totalorder %v246, 1
    %vm263 = vcmp.ge.s32.totalorder %v247, 1
    %vm264 = vcmp.ge.s32.totalorder %v248, 1
    %vm265 = vcmp.ge.s32.totalorder %v249, 1
    %v266 = vrot.slane %v25, 7
    %v267 = vrot.slane %v26, 7
    %v268 = vrot.slane %v27, 7
    %v269 = vrot.slane %v28, 7
    %v270 = vrot.slane %v29, 7
    %v271 = vrot.slane %v30, 7
    %v272 = vrot.slane %v31, 7
    %v273 = vrot.slane %v32, 7
    %v274 = vrot.slane %v33, 7
    %v275 = vrot.slane %v34, 7
    %v276 = vrot.slane %v35, 7
    %v277 = vrot.slane %v36, 7
    %v278 = vrot.slane %v37, 7
    %v279 = vrot.slane %v38, 7
    %v280 = vrot.slane %v39, 7
    %v281 = vrot.slane %v40, 7
    %vm282 = vcmp.lt.s32.totalorder %v42, 1
    %v283 = vsel %vm282, %v280, %v281
    %v284 = vsel %vm282, %v279, %v280
    %v285 = vsel %vm282, %v278, %v279
    %v286 = vsel %vm282, %v277, %v278
    %v287 = vsel %vm282, %v276, %v277
    %v288 = vsel %vm282, %v275, %v276
    %v289 = vsel %vm282, %v274, %v275
    %v290 = vsel %vm282, %v273, %v274
    %v291 = vsel %vm282, %v272, %v273
    %v292 = vsel %vm282, %v271, %v272
    %v293 = vsel %vm282, %v270, %v271
    %v294 = vsel %vm282, %v269, %v270
    %v295 = vsel %vm282, %v268, %v269
    %v296 = vsel %vm282, %v267, %v268
    %v297 = vsel %vm282, %v266, %v267
    %v298 = vsel %vm282, %v281, %v266
    %v299 = vsel %vm250, 1, 0
    %v300 = vsel %vm251, 1, 0
    %v301 = vsel %vm252, 1, 0
    %v302 = vsel %vm253, 1, 0
    %v303 = vsel %vm254, 1, 0
    %v304 = vsel %vm255, 1, 0
    %v305 = vsel %vm256, 1, 0
    %v306 = vsel %vm257, 1, 0
    %v307 = vsel %vm258, 1, 0
    %v308 = vsel %vm259, 1, 0
    %v309 = vsel %vm260, 1, 0
    %v310 = vsel %vm261, 1, 0
    %v311 = vsel %vm262, 1, 0
    %v312 = vsel %vm263, 1, 0
    %v313 = vsel %vm264, 1, 0
    %v314 = vsel %vm265, 1, 0
    %vm315 = vcmp.eq.s32.totalorder %v299, 1
    %vm316 = vcmp.eq.s32.totalorder %v300, 1
    %vm317 = vcmp.eq.s32.totalorder %v301, 1
    %vm318 = vcmp.eq.s32.totalorder %v302, 1
    %vm319 = vcmp.eq.s32.totalorder %v303, 1
    %vm320 = vcmp.eq.s32.totalorder %v304, 1
    %vm321 = vcmp.eq.s32.totalorder %v305, 1
    %vm322 = vcmp.eq.s32.totalorder %v306, 1
    %vm323 = vcmp.eq.s32.totalorder %v307, 1
    %vm324 = vcmp.eq.s32.totalorder %v308, 1
    %vm325 = vcmp.eq.s32.totalorder %v309, 1
    %vm326 = vcmp.eq.s32.totalorder %v310, 1
    %vm327 = vcmp.eq.s32.totalorder %v311, 1
    %vm328 = vcmp.eq.s32.totalorder %v312, 1
    %vm329 = vcmp.eq.s32.totalorder %v313, 1
    %vm330 = vcmp.eq.s32.totalorder %v314, 1
    %v331 = vsel %vm315, %v298, 0.0
    %v332 = vsel %vm316, %v297, 0.0
    %v333 = vsel %vm317, %v296, 0.0
    %v334 = vsel %vm318, %v295, 0.0
    %v335 = vsel %vm319, %v294, 0.0
    %v336 = vsel %vm320, %v293, 0.0
    %v337 = vsel %vm321, %v292, 0.0
    %v338 = vsel %vm322, %v291, 0.0
    %v339 = vsel %vm323, %v290, 0.0
    %v340 = vsel %vm324, %v289, 0.0
    %v341 = vsel %vm325, %v288, 0.0
    %v342 = vsel %vm326, %v287, 0.0
    %v343 = vsel %vm327, %v286, 0.0
    %v344 = vsel %vm328, %v285, 0.0
    %v345 = vsel %vm329, %v284, 0.0
    %v346 = vsel %vm330, %v283, 0.0
    %vm347 = vcmp.le.s32.totalorder %v234, 62
    %vm348 = vcmp.le.s32.totalorder %v235, 62
    %vm349 = vcmp.le.s32.totalorder %v236, 62
    %vm350 = vcmp.le.s32.totalorder %v237, 62
    %vm351 = vcmp.le.s32.totalorder %v238, 62
    %vm352 = vcmp.le.s32.totalorder %v239, 62
    %vm353 = vcmp.le.s32.totalorder %v240, 62
    %vm354 = vcmp.le.s32.totalorder %v241, 62
    %vm355 = vcmp.le.s32.totalorder %v242, 62
    %vm356 = vcmp.le.s32.totalorder %v243, 62
    %vm357 = vcmp.le.s32.totalorder %v244, 62
    %vm358 = vcmp.le.s32.totalorder %v245, 62
    %vm359 = vcmp.le.s32.totalorder %v246, 62
    %vm360 = vcmp.le.s32.totalorder %v247, 62
    %vm361 = vcmp.le.s32.totalorder %v248, 62
    %vm362 = vcmp.le.s32.totalorder %v249, 62
    %v363 = vrot.slane %v25, 1
    %v364 = vrot.slane %v26, 1
    %v365 = vrot.slane %v27, 1
    %v366 = vrot.slane %v28, 1
    %v367 = vrot.slane %v29, 1
    %v368 = vrot.slane %v30, 1
    %v369 = vrot.slane %v31, 1
    %v370 = vrot.slane %v32, 1
    %v371 = vrot.slane %v33, 1
    %v372 = vrot.slane %v34, 1
    %v373 = vrot.slane %v35, 1
    %v374 = vrot.slane %v36, 1
    %v375 = vrot.slane %v37, 1
    %v376 = vrot.slane %v38, 1
    %v377 = vrot.slane %v39, 1
    %v378 = vrot.slane %v40, 1
    %vm379 = vcmp.lt.s32.totalorder %v42, 7
    %v380 = vsel %vm379, %v377, %v378
    %v381 = vsel %vm379, %v376, %v377
    %v382 = vsel %vm379, %v375, %v376
    %v383 = vsel %vm379, %v374, %v375
    %v384 = vsel %vm379, %v373, %v374
    %v385 = vsel %vm379, %v372, %v373
    %v386 = vsel %vm379, %v371, %v372
    %v387 = vsel %vm379, %v370, %v371
    %v388 = vsel %vm379, %v369, %v370
    %v389 = vsel %vm379, %v368, %v369
    %v390 = vsel %vm379, %v367, %v368
    %v391 = vsel %vm379, %v366, %v367
    %v392 = vsel %vm379, %v365, %v366
    %v393 = vsel %vm379, %v364, %v365
    %v394 = vsel %vm379, %v363, %v364
    %v395 = vsel %vm379, %v378, %v363
    %v396 = vsel %vm347, 1, 0
    %v397 = vsel %vm348, 1, 0
    %v398 = vsel %vm349, 1, 0
    %v399 = vsel %vm350, 1, 0
    %v400 = vsel %vm351, 1, 0
    %v401 = vsel %vm352, 1, 0
    %v402 = vsel %vm353, 1, 0
    %v403 = vsel %vm354, 1, 0
    %v404 = vsel %vm355, 1, 0
    %v405 = vsel %vm356, 1, 0
    %v406 = vsel %vm357, 1, 0
    %v407 = vsel %vm358, 1, 0
    %v408 = vsel %vm359, 1, 0
    %v409 = vsel %vm360, 1, 0
    %v410 = vsel %vm361, 1, 0
    %v411 = vsel %vm362, 1, 0
    %vm412 = vcmp.eq.s32.totalorder %v396, 1
    %vm413 = vcmp.eq.s32.totalorder %v397, 1
    %vm414 = vcmp.eq.s32.totalorder %v398, 1
    %vm415 = vcmp.eq.s32.totalorder %v399, 1
    %vm416 = vcmp.eq.s32.totalorder %v400, 1
    %vm417 = vcmp.eq.s32.totalorder %v401, 1
    %vm418 = vcmp.eq.s32.totalorder %v402, 1
    %vm419 = vcmp.eq.s32.totalorder %v403, 1
    %vm420 = vcmp.eq.s32.totalorder %v404, 1
    %vm421 = vcmp.eq.s32.totalorder %v405, 1
    %vm422 = vcmp.eq.s32.totalorder %v406, 1
    %vm423 = vcmp.eq.s32.totalorder %v407, 1
    %vm424 = vcmp.eq.s32.totalorder %v408, 1
    %vm425 = vcmp.eq.s32.totalorder %v409, 1
    %vm426 = vcmp.eq.s32.totalorder %v410, 1
    %vm427 = vcmp.eq.s32.totalorder %v411, 1
    %v428 = vsel %vm412, %v394, 0.0
    %v429 = vsel %vm413, %v393, 0.0
    %v430 = vsel %vm414, %v392, 0.0
    %v431 = vsel %vm415, %v391, 0.0
    %v432 = vsel %vm416, %v390, 0.0
    %v433 = vsel %vm417, %v389, 0.0
    %v434 = vsel %vm418, %v388, 0.0
    %v435 = vsel %vm419, %v387, 0.0
    %v436 = vsel %vm420, %v386, 0.0
    %v437 = vsel %vm421, %v385, 0.0
    %v438 = vsel %vm422, %v384, 0.0
    %v439 = vsel %vm423, %v383, 0.0
    %v440 = vsel %vm424, %v382, 0.0
    %v441 = vsel %vm425, %v381, 0.0
    %v442 = vsel %vm426, %v380, 0.0
    %v443 = vsel %vm427, %v395, 0.0
    %v444 = vpack.c.bf16 %v332, %v331
    %v445 = vpack.c.bf16 %v26, %v25
    %v446 = vpack.c.bf16 %v429, %v428
    %v447 = vpack.c.bf16 %v334, %v333
    %v448 = vpack.c.bf16 %v28, %v27
    %v449 = vpack.c.bf16 %v431, %v430
    %v450 = vpack.c.bf16 %v336, %v335
    %v451 = vpack.c.bf16 %v30, %v29
    %v452 = vpack.c.bf16 %v433, %v432
    %v453 = vpack.c.bf16 %v338, %v337
    %v454 = vpack.c.bf16 %v32, %v31
    %v455 = vpack.c.bf16 %v435, %v434
    %v456 = vpack.c.bf16 %v340, %v339
    %v457 = vpack.c.bf16 %v34, %v33
    %v458 = vpack.c.bf16 %v437, %v436
    %v459 = vpack.c.bf16 %v342, %v341
    %v460 = vpack.c.bf16 %v36, %v35
    %v461 = vpack.c.bf16 %v439, %v438
    %v462 = vpack.c.bf16 %v344, %v343
    %v463 = vpack.c.bf16 %v38, %v37
    %v464 = vpack.c.bf16 %v441, %v440
    %v465 = vpack.c.bf16 %v346, %v345
    %v466 = vpack.c.bf16 %v40, %v39
    %v467 = vpack.c.bf16 %v443, %v442
    %v468 = vld [vmem:[%s1] sm:$0xf]
    %v469 = vld [vmem:[%s1 + $0x4] sm:$0xf]
    %v470 = vld [vmem:[%s1 + $0x8] sm:$0xf]
    %v471 = vld [vmem:[%s1 + $0xc] sm:$0xf]
    %v472 = vld [vmem:[%s1 + $0x10] sm:$0xf]
    %v473 = vld [vmem:[%s1 + $0x14] sm:$0xf]
    %v474 = vld [vmem:[%s1 + $0x18] sm:$0xf]
    %v475 = vld [vmem:[%s1 + $0x1c] sm:$0xf]
    %v476 = vld [vmem:[%s1 + $0x20] sm:$0xf]
    %v477 = vld [vmem:[%s1 + $0x24] sm:$0xf]
    %v478 = vld [vmem:[%s1 + $0x28] sm:$0xf]
    %v479 = vld [vmem:[%s1 + $0x2c] sm:$0xf]
    %v480 = vld [vmem:[%s1 + $0x30] sm:$0xf]
    %v481 = vld [vmem:[%s1 + $0x34] sm:$0xf]
    %v482 = vld [vmem:[%s1 + $0x38] sm:$0xf]
    %v483 = vld [vmem:[%s1 + $0x3c] sm:$0xf]
    %v484 = vld [vmem:[%s1 + $0x40] sm:$0xf]
    %v485 = vld [vmem:[%s1 + $0x44] sm:$0xf]
    %v486 = vld [vmem:[%s1 + $0x48] sm:$0xf]
    %v487 = vld [vmem:[%s1 + $0x4c] sm:$0xf]
    %v488 = vld [vmem:[%s1 + $0x50] sm:$0xf]
    %v489 = vld [vmem:[%s1 + $0x54] sm:$0xf]
    %v490 = vld [vmem:[%s1 + $0x58] sm:$0xf]
    %v491 = vld [vmem:[%s1 + $0x5c] sm:$0xf]
    %v492 = vld [vmem:[%s1 + $0x60] sm:$0xf]
    %v493 = vld [vmem:[%s1 + $0x64] sm:$0xf]
    %v494 = vld [vmem:[%s1 + $0x68] sm:$0xf]
    %v495 = vld [vmem:[%s1 + $0x6c] sm:$0xf]
    %v496 = vld [vmem:[%s1 + $0x70] sm:$0xf]
    %v497 = vld [vmem:[%s1 + $0x74] sm:$0xf]
    %v498 = vld [vmem:[%s1 + $0x78] sm:$0xf]
    %v499 = vld [vmem:[%s1 + $0x7c] sm:$0xf]
    %v500 = vld [vmem:[%s1 + $0x80] sm:$0xf]
    %v501 = vld [vmem:[%s1 + $0x84] sm:$0xf]
    %v502 = vld [vmem:[%s1 + $0x88] sm:$0xf]
    %v503 = vld [vmem:[%s1 + $0x8c] sm:$0xf]
    %v504 = vld [vmem:[%s1 + $0x90] sm:$0xf]
    %v505 = vld [vmem:[%s1 + $0x94] sm:$0xf]
    %v506 = vld [vmem:[%s1 + $0x98] sm:$0xf]
    %v507 = vld [vmem:[%s1 + $0x9c] sm:$0xf]
    %v508 = vld [vmem:[%s1 + $0xa0] sm:$0xf]
    %v509 = vld [vmem:[%s1 + $0xa4] sm:$0xf]
    %v510 = vld [vmem:[%s1 + $0xa8] sm:$0xf]
    %v511 = vld [vmem:[%s1 + $0xac] sm:$0xf]
    %v512 = vld [vmem:[%s1 + $0xb0] sm:$0xf]
    %v513 = vld [vmem:[%s1 + $0xb4] sm:$0xf]
    %v514 = vld [vmem:[%s1 + $0xb8] sm:$0xf]
    %v515 = vld [vmem:[%s1 + $0xbc] sm:$0xf]
    %v516 = vld [vmem:[%s2] sm:$0x1]
    %v518 = vlaneseq
    %v519 = vshrl.u32 %v518, 7
    %v520 = vsub.s32 0, %v519
    %v521 = vrot.slane %v516, %v520
    %v571 = vunpack.c.l.b16 %v468
    %v572 = vunpack.c.l.b16 %v469
    %v573 = vunpack.c.l.b16 %v470
    %v574 = vunpack.c.l.b16 %v471
    %v575 = vunpack.c.l.b16 %v472
    %v576 = vunpack.c.l.b16 %v473
    %v577 = vunpack.c.l.b16 %v474
    %v578 = vunpack.c.l.b16 %v475
    %v579 = vunpack.c.l.b16 %v476
    %v580 = vunpack.c.l.b16 %v477
    %v581 = vunpack.c.l.b16 %v478
    %v582 = vunpack.c.l.b16 %v479
    %v583 = vunpack.c.l.b16 %v480
    %v584 = vunpack.c.l.b16 %v481
    %v585 = vunpack.c.l.b16 %v482
    %v586 = vunpack.c.l.b16 %v483
    %v587 = vunpack.c.l.b16 %v484
    %v588 = vunpack.c.l.b16 %v485
    %v589 = vunpack.c.l.b16 %v486
    %v590 = vunpack.c.l.b16 %v487
    %v591 = vunpack.c.l.b16 %v488
    %v592 = vunpack.c.l.b16 %v489
    %v593 = vunpack.c.l.b16 %v490
    %v594 = vunpack.c.l.b16 %v491
    %v595 = vunpack.c.l.b16 %v492
    %v596 = vunpack.c.l.b16 %v493
    %v597 = vunpack.c.l.b16 %v494
    %v598 = vunpack.c.l.b16 %v495
    %v599 = vunpack.c.l.b16 %v496
    %v600 = vunpack.c.l.b16 %v497
    %v601 = vunpack.c.l.b16 %v498
    %v602 = vunpack.c.l.b16 %v499
    %v603 = vunpack.c.l.b16 %v500
    %v604 = vunpack.c.l.b16 %v501
    %v605 = vunpack.c.l.b16 %v502
    %v606 = vunpack.c.l.b16 %v503
    %v607 = vunpack.c.l.b16 %v504
    %v608 = vunpack.c.l.b16 %v505
    %v609 = vunpack.c.l.b16 %v506
    %v610 = vunpack.c.l.b16 %v507
    %v611 = vunpack.c.l.b16 %v508
    %v612 = vunpack.c.l.b16 %v509
    %v613 = vunpack.c.l.b16 %v510
    %v614 = vunpack.c.l.b16 %v511
    %v615 = vunpack.c.l.b16 %v512
    %v616 = vunpack.c.l.b16 %v513
    %v617 = vunpack.c.l.b16 %v514
    %v618 = vunpack.c.l.b16 %v515
    %v619 = vpack.c.b16 %v572, %v571
    %v620 = vpack.c.b16 %v574, %v573
    %v621 = vpack.c.b16 %v576, %v575
    %v622 = vpack.c.b16 %v578, %v577
    %v623 = vpack.c.b16 %v580, %v579
    %v624 = vpack.c.b16 %v582, %v581
    %v625 = vpack.c.b16 %v584, %v583
    %v626 = vpack.c.b16 %v586, %v585
    %v627 = vpack.c.b16 %v588, %v587
    %v628 = vpack.c.b16 %v590, %v589
    %v629 = vpack.c.b16 %v592, %v591
    %v630 = vpack.c.b16 %v594, %v593
    %v631 = vpack.c.b16 %v596, %v595
    %v632 = vpack.c.b16 %v598, %v597
    %v633 = vpack.c.b16 %v600, %v599
    %v634 = vpack.c.b16 %v602, %v601
    %v635 = vpack.c.b16 %v604, %v603
    %v636 = vpack.c.b16 %v606, %v605
    %v637 = vpack.c.b16 %v608, %v607
    %v638 = vpack.c.b16 %v610, %v609
    %v639 = vpack.c.b16 %v612, %v611
    %v640 = vpack.c.b16 %v614, %v613
    %v641 = vpack.c.b16 %v616, %v615
    %v642 = vpack.c.b16 %v618, %v617
    %667 = vmatprep.subr.bf16.mxu0 0
    %668 = vmatpush1.bf16.msra.mxu0 %v619
    %669 = vmatprep.subr.bf16.mxu0 0
    %670 = vmatpush1.bf16.msra.mxu0 %v620
    %671 = vmatprep.subr.bf16.mxu0 0
    %672 = vmatpush1.bf16.msra.mxu0 %v621
    %673 = vmatprep.subr.bf16.mxu0 0
    %674 = vmatpush1.bf16.msra.mxu0 %v622
    %675 = vmatprep.subr.bf16.mxu0 0
    %676 = vmatpush1.bf16.msra.mxu0 %v623
    %677 = vmatprep.subr.bf16.mxu0 0
    %678 = vmatpush1.bf16.msra.mxu0 %v624
    %679 = vmatprep.subr.bf16.mxu0 0
    %680 = vmatpush1.bf16.msra.mxu0 %v625
    %681 = vmatprep.subr.bf16.mxu0 0
    %682 = vmatpush1.bf16.msra.mxu0 %v626
    %683 = vmatprep.subr.bf16.mxu0 0
    %684 = vmatpush1.bf16.msra.mxu0 %v627
    %685 = vmatprep.subr.bf16.mxu0 0
    %686 = vmatpush1.bf16.msra.mxu0 %v628
    %687 = vmatprep.subr.bf16.mxu0 0
    %688 = vmatpush1.bf16.msra.mxu0 %v629
    %689 = vmatprep.subr.bf16.mxu0 0
    %690 = vmatpush1.bf16.msra.mxu0 %v630
    %691 = vmatprep.subr.bf16.mxu0 0
    %692 = vmatpush1.bf16.msra.mxu0 %v631
    %693 = vmatprep.subr.bf16.mxu0 0
    %694 = vmatpush1.bf16.msra.mxu0 %v632
    %695 = vmatprep.subr.bf16.mxu0 0
    %696 = vmatpush1.bf16.msra.mxu0 %v633
    %697 = vmatprep.subr.bf16.mxu0 0
    %698 = vmatpush1.bf16.msra.mxu0 %v634
    %699 = vmatprep.mubr.bf16.mxu0 %v445
    %700 = vmatmul.mubr.bf16.gmra.mrb[0].mxu0 %v444
    %v701 = vpop.f32.mrb[0].mxu0
    %v702 = vadd.f32 %v521, %v701
    %v703 = vpop.f32.mrb[0].mxu0
    %v704 = vpop.f32.mrb[0].mxu0
    %v705 = vadd.f32 %v521, %v704
    %v706 = vpop.f32.mrb[0].mxu0
    %707 = vmatprep.mubr.bf16.mxu0 %v448
    %708 = vmatmul.mubr.bf16.gmra.mrb[0].mxu0 %v447
    %v709 = vpop.f32.mrb[0].mxu0
    %v710 = vadd.f32 %v521, %v709
    %v711 = vpop.f32.mrb[0].mxu0
    %v712 = vpop.f32.mrb[0].mxu0
    %v713 = vadd.f32 %v521, %v712
    %v714 = vpop.f32.mrb[0].mxu0
    %715 = vmatprep.mubr.bf16.mxu0 %v451
    %716 = vmatmul.mubr.bf16.gmra.mrb[0].mxu0 %v450
    %v717 = vpop.f32.mrb[0].mxu0
    %v718 = vadd.f32 %v521, %v717
    %v719 = vpop.f32.mrb[0].mxu0
    %v720 = vpop.f32.mrb[0].mxu0
    %v721 = vadd.f32 %v521, %v720
    %v722 = vpop.f32.mrb[0].mxu0
    %723 = vmatprep.mubr.bf16.mxu0 %v454
    %724 = vmatmul.mubr.bf16.gmra.mrb[0].mxu0 %v453
    %v725 = vpop.f32.mrb[0].mxu0
    %v726 = vadd.f32 %v521, %v725
    %v727 = vpop.f32.mrb[0].mxu0
    %v728 = vpop.f32.mrb[0].mxu0
    %v729 = vadd.f32 %v521, %v728
    %v730 = vpop.f32.mrb[0].mxu0
    %731 = vmatprep.mubr.bf16.mxu0 %v457
    %732 = vmatmul.mubr.bf16.gmra.mrb[0].mxu0 %v456
    %v733 = vpop.f32.mrb[0].mxu0
    %v734 = vadd.f32 %v521, %v733
    %v735 = vpop.f32.mrb[0].mxu0
    %v736 = vpop.f32.mrb[0].mxu0
    %v737 = vadd.f32 %v521, %v736
    %v738 = vpop.f32.mrb[0].mxu0
    %739 = vmatprep.mubr.bf16.mxu0 %v460
    %740 = vmatmul.mubr.bf16.gmra.mrb[0].mxu0 %v459
    %v741 = vpop.f32.mrb[0].mxu0
    %v742 = vadd.f32 %v521, %v741
    %v743 = vpop.f32.mrb[0].mxu0
    %v744 = vpop.f32.mrb[0].mxu0
    %v745 = vadd.f32 %v521, %v744
    %v746 = vpop.f32.mrb[0].mxu0
    %747 = vmatprep.mubr.bf16.mxu0 %v463
    %748 = vmatmul.mubr.bf16.gmra.mrb[0].mxu0 %v462
    %v749 = vpop.f32.mrb[0].mxu0
    %v750 = vadd.f32 %v521, %v749
    %v751 = vpop.f32.mrb[0].mxu0
    %v752 = vpop.f32.mrb[0].mxu0
    %v753 = vadd.f32 %v521, %v752
    %v754 = vpop.f32.mrb[0].mxu0
    %755 = vmatprep.mubr.bf16.mxu0 %v466
    %756 = vmatmul.mubr.bf16.gmra.mrb[0].mxu0 %v465
    %v757 = vpop.f32.mrb[0].mxu0
    %v758 = vadd.f32 %v521, %v757
    %v759 = vpop.f32.mrb[0].mxu0
    %v760 = vpop.f32.mrb[0].mxu0
    %v761 = vadd.f32 %v521, %v760
    %v762 = vpop.f32.mrb[0].mxu0
    %763 = vdwg.mxu0
    %764 = vmatprep.subr.bf16.mxu0 0
    %765 = vmatpush1.bf16.msra.mxu0 %v635
    %766 = vmatprep.subr.bf16.mxu0 0
    %767 = vmatpush1.bf16.msra.mxu0 %v636
    %768 = vmatprep.subr.bf16.mxu0 0
    %769 = vmatpush1.bf16.msra.mxu0 %v637
    %770 = vmatprep.subr.bf16.mxu0 0
    %771 = vmatpush1.bf16.msra.mxu0 %v638
    %772 = vmatprep.subr.bf16.mxu0 0
    %773 = vmatpush1.bf16.msra.mxu0 %v639
    %774 = vmatprep.subr.bf16.mxu0 0
    %775 = vmatpush1.bf16.msra.mxu0 %v640
    %776 = vmatprep.subr.bf16.mxu0 0
    %777 = vmatpush1.bf16.msra.mxu0 %v641
    %778 = vmatprep.subr.bf16.mxu0 0
    %779 = vmatpush1.bf16.msra.mxu0 %v642
    %780 = vmatprep.subr.bf16.mxu0 0
    %781 = vmatpush1.bf16.msra.mxu0 0
    %782 = vmatprep.subr.bf16.mxu0 0
    %783 = vmatpush1.bf16.msra.mxu0 0
    %784 = vmatprep.subr.bf16.mxu0 0
    %785 = vmatpush1.bf16.msra.mxu0 0
    %786 = vmatprep.subr.bf16.mxu0 0
    %787 = vmatpush1.bf16.msra.mxu0 0
    %788 = vmatprep.subr.bf16.mxu0 0
    %789 = vmatpush1.bf16.msra.mxu0 0
    %790 = vmatprep.subr.bf16.mxu0 0
    %791 = vmatpush1.bf16.msra.mxu0 0
    %792 = vmatprep.subr.bf16.mxu0 0
    %793 = vmatpush1.bf16.msra.mxu0 0
    %794 = vmatprep.subr.bf16.mxu0 0
    %795 = vmatpush1.bf16.msra.mxu0 0
    %796 = vmatprep.mubr.bf16.mxu0 0
    %797 = vmatmul.mubr.bf16.gmra.mrb[0].mxu0 %v446
    %v798 = vpop.f32.mrb[0].mxu0
    %v799 = vadd.f32 %v702, %v798
    %v800 = vpop.f32.mrb[0].mxu0
    %v801 = vpop.f32.mrb[0].mxu0
    %v802 = vadd.f32 %v705, %v801
    %v803 = vpop.f32.mrb[0].mxu0
    %804 = vmatprep.mubr.bf16.mxu0 0
    %805 = vmatmul.mubr.bf16.gmra.mrb[0].mxu0 %v449
    %v806 = vpop.f32.mrb[0].mxu0
    %v807 = vadd.f32 %v710, %v806
    %v808 = vpop.f32.mrb[0].mxu0
    %v809 = vpop.f32.mrb[0].mxu0
    %v810 = vadd.f32 %v713, %v809
    %v811 = vpop.f32.mrb[0].mxu0
    %812 = vmatprep.mubr.bf16.mxu0 0
    %813 = vmatmul.mubr.bf16.gmra.mrb[0].mxu0 %v452
    %v814 = vpop.f32.mrb[0].mxu0
    %v815 = vadd.f32 %v718, %v814
    %v816 = vpop.f32.mrb[0].mxu0
    %v817 = vpop.f32.mrb[0].mxu0
    %v818 = vadd.f32 %v721, %v817
    %v819 = vpop.f32.mrb[0].mxu0
    %820 = vmatprep.mubr.bf16.mxu0 0
    %821 = vmatmul.mubr.bf16.gmra.mrb[0].mxu0 %v455
    %v822 = vpop.f32.mrb[0].mxu0
    %v823 = vadd.f32 %v726, %v822
    %v824 = vpop.f32.mrb[0].mxu0
    %v825 = vpop.f32.mrb[0].mxu0
    %v826 = vadd.f32 %v729, %v825
    %v827 = vpop.f32.mrb[0].mxu0
    %828 = vmatprep.mubr.bf16.mxu0 0
    %829 = vmatmul.mubr.bf16.gmra.mrb[0].mxu0 %v458
    %v830 = vpop.f32.mrb[0].mxu0
    %v831 = vadd.f32 %v734, %v830
    %v832 = vpop.f32.mrb[0].mxu0
    %v833 = vpop.f32.mrb[0].mxu0
    %v834 = vadd.f32 %v737, %v833
    %v835 = vpop.f32.mrb[0].mxu0
    %836 = vmatprep.mubr.bf16.mxu0 0
    %837 = vmatmul.mubr.bf16.gmra.mrb[0].mxu0 %v461
    %v838 = vpop.f32.mrb[0].mxu0
    %v839 = vadd.f32 %v742, %v838
    %v840 = vpop.f32.mrb[0].mxu0
    %v841 = vpop.f32.mrb[0].mxu0
    %v842 = vadd.f32 %v745, %v841
    %v843 = vpop.f32.mrb[0].mxu0
    %844 = vmatprep.mubr.bf16.mxu0 0
    %845 = vmatmul.mubr.bf16.gmra.mrb[0].mxu0 %v464
    %v846 = vpop.f32.mrb[0].mxu0
    %v847 = vadd.f32 %v750, %v846
    %v848 = vpop.f32.mrb[0].mxu0
    %v849 = vpop.f32.mrb[0].mxu0
    %v850 = vadd.f32 %v753, %v849
    %v851 = vpop.f32.mrb[0].mxu0
    %852 = vmatprep.mubr.bf16.mxu0 0
    %853 = vmatmul.mubr.bf16.gmra.mrb[0].mxu0 %v467
    %v854 = vpop.f32.mrb[0].mxu0
    %v855 = vadd.f32 %v758, %v854
    %v856 = vpop.f32.mrb[0].mxu0
    %v857 = vpop.f32.mrb[0].mxu0
    %v858 = vadd.f32 %v761, %v857
    %v859 = vpop.f32.mrb[0].mxu0
    %860 = vdwg.mxu0
    %861 = vst [vmem:[#allocation2] sm:$0xff] %v799
    %862 = vst [vmem:[#allocation2 + $0x8] sm:$0xff] %v802
    %863 = vst [vmem:[#allocation2 + $0x10] sm:$0xff] %v807
    %864 = vst [vmem:[#allocation2 + $0x18] sm:$0xff] %v810
    %865 = vst [vmem:[#allocation2 + $0x20] sm:$0xff] %v815
    %866 = vst [vmem:[#allocation2 + $0x28] sm:$0xff] %v818
    %867 = vst [vmem:[#allocation2 + $0x30] sm:$0xff] %v823
    %868 = vst [vmem:[#allocation2 + $0x38] sm:$0xff] %v826
    %869 = vst [vmem:[#allocation2 + $0x40] sm:$0xff] %v831
    %870 = vst [vmem:[#allocation2 + $0x48] sm:$0xff] %v834
    %871 = vst [vmem:[#allocation2 + $0x50] sm:$0xff] %v839
    %872 = vst [vmem:[#allocation2 + $0x58] sm:$0xff] %v842
    %873 = vst [vmem:[#allocation2 + $0x60] sm:$0xff] %v847
    %874 = vst [vmem:[#allocation2 + $0x68] sm:$0xff] %v850
    %875 = vst [vmem:[#allocation2 + $0x70] sm:$0xff] %v855
    %876 = vst [vmem:[#allocation2 + $0x78] sm:$0xff] %v858
    %v878 = vunpack.c.l.s4 1966171168
    %v879 = vunpack.c.0.s8 %v878
    %v880 = vlaneseq
    %v881 = vshrl.u32 %v880, 7
    %v882 = vsub.s32 %v879, %v881
    %v883 = vrot.slane %v799, %v882
    %v885 = vunpack.c.l.s4 1966171168
    %v886 = vunpack.c.0.s8 %v885
    %v887 = vlaneseq
    %v888 = vshrl.u32 %v887, 7
    %v889 = vsub.s32 %v886, %v888
    %v890 = vrot.slane %v802, %v889
    %v892 = vunpack.c.l.s4 1966171168
    %v893 = vunpack.c.0.s8 %v892
    %v894 = vlaneseq
    %v895 = vshrl.u32 %v894, 7
    %v896 = vsub.s32 %v893, %v895
    %v897 = vrot.slane %v807, %v896
    %v899 = vunpack.c.l.s4 1966171168
    %v900 = vunpack.c.0.s8 %v899
    %v901 = vlaneseq
    %v902 = vshrl.u32 %v901, 7
    %v903 = vsub.s32 %v900, %v902
    %v904 = vrot.slane %v810, %v903
    %v906 = vunpack.c.l.s4 1966171168
    %v907 = vunpack.c.0.s8 %v906
    %v908 = vlaneseq
    %v909 = vshrl.u32 %v908, 7
    %v910 = vsub.s32 %v907, %v909
    %v911 = vrot.slane %v815, %v910
    %v913 = vunpack.c.l.s4 1966171168
    %v914 = vunpack.c.0.s8 %v913
    %v915 = vlaneseq
    %v916 = vshrl.u32 %v915, 7
    %v917 = vsub.s32 %v914, %v916
    %v918 = vrot.slane %v818, %v917
    %v920 = vunpack.c.l.s4 1966171168
    %v921 = vunpack.c.0.s8 %v920
    %v922 = vlaneseq
    %v923 = vshrl.u32 %v922, 7
    %v924 = vsub.s32 %v921, %v923
    %v925 = vrot.slane %v823, %v924
    %v927 = vunpack.c.l.s4 1966171168
    %v928 = vunpack.c.0.s8 %v927
    %v929 = vlaneseq
    %v930 = vshrl.u32 %v929, 7
    %v931 = vsub.s32 %v928, %v930
    %v932 = vrot.slane %v826, %v931
    %v934 = vunpack.c.l.s4 1966171168
    %v935 = vunpack.c.0.s8 %v934
    %v936 = vlaneseq
    %v937 = vshrl.u32 %v936, 7
    %v938 = vsub.s32 %v935, %v937
    %v939 = vrot.slane %v831, %v938
    %v941 = vunpack.c.l.s4 1966171168
    %v942 = vunpack.c.0.s8 %v941
    %v943 = vlaneseq
    %v944 = vshrl.u32 %v943, 7
    %v945 = vsub.s32 %v942, %v944
    %v946 = vrot.slane %v834, %v945
    %v948 = vunpack.c.l.s4 1966171168
    %v949 = vunpack.c.0.s8 %v948
    %v950 = vlaneseq
    %v951 = vshrl.u32 %v950, 7
    %v952 = vsub.s32 %v949, %v951
    %v953 = vrot.slane %v839, %v952
    %v955 = vunpack.c.l.s4 1966171168
    %v956 = vunpack.c.0.s8 %v955
    %v957 = vlaneseq
    %v958 = vshrl.u32 %v957, 7
    %v959 = vsub.s32 %v956, %v958
    %v960 = vrot.slane %v842, %v959
    %v962 = vunpack.c.l.s4 1966171168
    %v963 = vunpack.c.0.s8 %v962
    %v964 = vlaneseq
    %v965 = vshrl.u32 %v964, 7
    %v966 = vsub.s32 %v963, %v965
    %v967 = vrot.slane %v847, %v966
    %v969 = vunpack.c.l.s4 1966171168
    %v970 = vunpack.c.0.s8 %v969
    %v971 = vlaneseq
    %v972 = vshrl.u32 %v971, 7
    %v973 = vsub.s32 %v970, %v972
    %v974 = vrot.slane %v850, %v973
    %v976 = vunpack.c.l.s4 1966171168
    %v977 = vunpack.c.0.s8 %v976
    %v978 = vlaneseq
    %v979 = vshrl.u32 %v978, 7
    %v980 = vsub.s32 %v977, %v979
    %v981 = vrot.slane %v855, %v980
    %v983 = vunpack.c.l.s4 1966171168
    %v984 = vunpack.c.0.s8 %v983
    %v985 = vlaneseq
    %v986 = vshrl.u32 %v985, 7
    %v987 = vsub.s32 %v984, %v986
    %v988 = vrot.slane %v858, %v987
    %vm989 = vcmp.lt.s32.totalorder %v42, 0
    %v990 = vsub.s32 0, %v42
    %v991 = vsel %vm989, %v990, %v42
    %v992 = vshrl.u32 %v991, 5
    %v993 = vand.u32 %v991, 31
    %v994 = vsub.s32 0, %v993
    %v995 = vsel %vm989, %v994, %v993
    %vm996 = vcmp.lt.s32.totalorder %v43, 0
    %v997 = vsub.s32 0, %v43
    %v998 = vsel %vm996, %v997, %v43
    %v999 = vshrl.u32 %v998, 5
    %v1000 = vand.u32 %v998, 31
    %v1001 = vsub.s32 0, %v1000
    %v1002 = vsel %vm996, %v1001, %v1000
    %vm1003 = vcmp.lt.s32.totalorder %v44, 0
    %v1004 = vsub.s32 0, %v44
    %v1005 = vsel %vm1003, %v1004, %v44
    %v1006 = vshrl.u32 %v1005, 5
    %v1007 = vand.u32 %v1005, 31
    %v1008 = vsub.s32 0, %v1007
    %v1009 = vsel %vm1003, %v1008, %v1007
    %vm1010 = vcmp.lt.s32.totalorder %v45, 0
    %v1011 = vsub.s32 0, %v45
    %v1012 = vsel %vm1010, %v1011, %v45
    %v1013 = vshrl.u32 %v1012, 5
    %v1014 = vand.u32 %v1012, 31
    %v1015 = vsub.s32 0, %v1014
    %v1016 = vsel %vm1010, %v1015, %v1014
    %vm1017 = vcmp.lt.s32.totalorder %v46, 0
    %v1018 = vsub.s32 0, %v46
    %v1019 = vsel %vm1017, %v1018, %v46
    %v1020 = vshrl.u32 %v1019, 5
    %v1021 = vand.u32 %v1019, 31
    %v1022 = vsub.s32 0, %v1021
    %v1023 = vsel %vm1017, %v1022, %v1021
    %vm1024 = vcmp.lt.s32.totalorder %v47, 0
    %v1025 = vsub.s32 0, %v47
    %v1026 = vsel %vm1024, %v1025, %v47
    %v1027 = vshrl.u32 %v1026, 5
    %v1028 = vand.u32 %v1026, 31
    %v1029 = vsub.s32 0, %v1028
    %v1030 = vsel %vm1024, %v1029, %v1028
    %vm1031 = vcmp.lt.s32.totalorder %v48, 0
    %v1032 = vsub.s32 0, %v48
    %v1033 = vsel %vm1031, %v1032, %v48
    %v1034 = vshrl.u32 %v1033, 5
    %v1035 = vand.u32 %v1033, 31
    %v1036 = vsub.s32 0, %v1035
    %v1037 = vsel %vm1031, %v1036, %v1035
    %vm1038 = vcmp.lt.s32.totalorder %v49, 0
    %v1039 = vsub.s32 0, %v49
    %v1040 = vsel %vm1038, %v1039, %v49
    %v1041 = vshrl.u32 %v1040, 5
    %v1042 = vand.u32 %v1040, 31
    %v1043 = vsub.s32 0, %v1042
    %v1044 = vsel %vm1038, %v1043, %v1042
    %vm1045 = vcmp.ne.s32.totalorder %v995, 0
    %vm1046 = vcmp.ne.s32.totalorder %v1002, 0
    %vm1047 = vcmp.ne.s32.totalorder %v1009, 0
    %vm1048 = vcmp.ne.s32.totalorder %v1016, 0
    %vm1049 = vcmp.ne.s32.totalorder %v1023, 0
    %vm1050 = vcmp.ne.s32.totalorder %v1030, 0
    %vm1051 = vcmp.ne.s32.totalorder %v1037, 0
    %vm1052 = vcmp.ne.s32.totalorder %v1044, 0
    %vm1053 = vcmp.lt.s32.totalorder %v995, 0
    %vm1054 = vcmp.lt.s32.totalorder %v1002, 0
    %vm1055 = vcmp.lt.s32.totalorder %v1009, 0
    %vm1056 = vcmp.lt.s32.totalorder %v1016, 0
    %vm1057 = vcmp.lt.s32.totalorder %v1023, 0
    %vm1058 = vcmp.lt.s32.totalorder %v1030, 0
    %vm1059 = vcmp.lt.s32.totalorder %v1037, 0
    %vm1060 = vcmp.lt.s32.totalorder %v1044, 0
    %vm1061 = vmand %vm1053, %vm1045
    %vm1062 = vmand %vm1054, %vm1046
    %vm1063 = vmand %vm1055, %vm1047
    %vm1064 = vmand %vm1056, %vm1048
    %vm1065 = vmand %vm1057, %vm1049
    %vm1066 = vmand %vm1058, %vm1050
    %vm1067 = vmand %vm1059, %vm1051
    %vm1068 = vmand %vm1060, %vm1052
    %v1069 = vadd.s32 %v995, 32
    %v1070 = vadd.s32 %v1002, 32
    %v1071 = vadd.s32 %v1009, 32
    %v1072 = vadd.s32 %v1016, 32
    %v1073 = vadd.s32 %v1023, 32
    %v1074 = vadd.s32 %v1030, 32
    %v1075 = vadd.s32 %v1037, 32
    %v1076 = vadd.s32 %v1044, 32
    %v1077 = vsel %vm1061, %v1069, %v995
    %v1078 = vsel %vm1062, %v1070, %v1002
    %v1079 = vsel %vm1063, %v1071, %v1009
    %v1080 = vsel %vm1064, %v1072, %v1016
    %v1081 = vsel %vm1065, %v1073, %v1023
    %v1082 = vsel %vm1066, %v1074, %v1030
    %v1083 = vsel %vm1067, %v1075, %v1037
    %v1084 = vsel %vm1068, %v1076, %v1044
    %vm1085 = vcmp.ge.s32.totalorder %v1077, 1
    %vm1086 = vcmp.ge.s32.totalorder %v1078, 1
    %vm1087 = vcmp.ge.s32.totalorder %v1079, 1
    %vm1088 = vcmp.ge.s32.totalorder %v1080, 1
    %vm1089 = vcmp.ge.s32.totalorder %v1081, 1
    %vm1090 = vcmp.ge.s32.totalorder %v1082, 1
    %vm1091 = vcmp.ge.s32.totalorder %v1083, 1
    %vm1092 = vcmp.ge.s32.totalorder %v1084, 1
    %v1109 = vcombine.high %v883, %v890
    %v1110 = vcombine.high %v897, %v904
    %v1111 = vcombine.high %v911, %v918
    %v1112 = vcombine.high %v925, %v932
    %v1113 = vcombine.high %v939, %v946
    %v1114 = vcombine.high %v953, %v960
    %v1115 = vcombine.high %v967, %v974
    %v1116 = vcombine.high %v981, %v988
    %v1125 = vrot.slane %v1109, 7
    %v1126 = vrot.slane %v1110, 7
    %v1127 = vrot.slane %v1111, 7
    %v1128 = vrot.slane %v1112, 7
    %v1129 = vrot.slane %v1113, 7
    %v1130 = vrot.slane %v1114, 7
    %v1131 = vrot.slane %v1115, 7
    %v1132 = vrot.slane %v1116, 7
    %v1133 = vsel %vm282, %v1131, %v1132
    %v1134 = vsel %vm282, %v1130, %v1131
    %v1135 = vsel %vm282, %v1129, %v1130
    %v1136 = vsel %vm282, %v1128, %v1129
    %v1137 = vsel %vm282, %v1127, %v1128
    %v1138 = vsel %vm282, %v1126, %v1127
    %v1139 = vsel %vm282, %v1125, %v1126
    %v1140 = vsel %vm282, %v1132, %v1125
    %v1141 = vsel %vm1085, 1, 0
    %v1142 = vsel %vm1086, 1, 0
    %v1143 = vsel %vm1087, 1, 0
    %v1144 = vsel %vm1088, 1, 0
    %v1145 = vsel %vm1089, 1, 0
    %v1146 = vsel %vm1090, 1, 0
    %v1147 = vsel %vm1091, 1, 0
    %v1148 = vsel %vm1092, 1, 0
    %vm1149 = vcmp.eq.s32.totalorder %v1141, 1
    %vm1150 = vcmp.eq.s32.totalorder %v1142, 1
    %vm1151 = vcmp.eq.s32.totalorder %v1143, 1
    %vm1152 = vcmp.eq.s32.totalorder %v1144, 1
    %vm1153 = vcmp.eq.s32.totalorder %v1145, 1
    %vm1154 = vcmp.eq.s32.totalorder %v1146, 1
    %vm1155 = vcmp.eq.s32.totalorder %v1147, 1
    %vm1156 = vcmp.eq.s32.totalorder %v1148, 1
    %v1157 = vsel %vm1149, %v1140, 0.0
    %v1158 = vsel %vm1150, %v1139, 0.0
    %v1159 = vsel %vm1151, %v1138, 0.0
    %v1160 = vsel %vm1152, %v1137, 0.0
    %v1161 = vsel %vm1153, %v1136, 0.0
    %v1162 = vsel %vm1154, %v1135, 0.0
    %v1163 = vsel %vm1155, %v1134, 0.0
    %v1164 = vsel %vm1156, %v1133, 0.0
    %vm1165 = vcmp.le.s32.totalorder %v1077, 30
    %vm1166 = vcmp.le.s32.totalorder %v1078, 30
    %vm1167 = vcmp.le.s32.totalorder %v1079, 30
    %vm1168 = vcmp.le.s32.totalorder %v1080, 30
    %vm1169 = vcmp.le.s32.totalorder %v1081, 30
    %vm1170 = vcmp.le.s32.totalorder %v1082, 30
    %vm1171 = vcmp.le.s32.totalorder %v1083, 30
    %vm1172 = vcmp.le.s32.totalorder %v1084, 30
    %v1173 = vcombine.low %v883, %v890
    %v1174 = vcombine.low %v897, %v904
    %v1175 = vcombine.low %v911, %v918
    %v1176 = vcombine.low %v925, %v932
    %v1177 = vcombine.low %v939, %v946
    %v1178 = vcombine.low %v953, %v960
    %v1179 = vcombine.low %v967, %v974
    %v1180 = vcombine.low %v981, %v988
    %v1189 = vrot.slane %v1173, 1
    %v1190 = vrot.slane %v1174, 1
    %v1191 = vrot.slane %v1175, 1
    %v1192 = vrot.slane %v1176, 1
    %v1193 = vrot.slane %v1177, 1
    %v1194 = vrot.slane %v1178, 1
    %v1195 = vrot.slane %v1179, 1
    %v1196 = vrot.slane %v1180, 1
    %v1197 = vsel %vm379, %v1195, %v1196
    %v1198 = vsel %vm379, %v1194, %v1195
    %v1199 = vsel %vm379, %v1193, %v1194
    %v1200 = vsel %vm379, %v1192, %v1193
    %v1201 = vsel %vm379, %v1191, %v1192
    %v1202 = vsel %vm379, %v1190, %v1191
    %v1203 = vsel %vm379, %v1189, %v1190
    %v1204 = vsel %vm379, %v1196, %v1189
    %v1205 = vsel %vm1165, 1, 0
    %v1206 = vsel %vm1166, 1, 0
    %v1207 = vsel %vm1167, 1, 0
    %v1208 = vsel %vm1168, 1, 0
    %v1209 = vsel %vm1169, 1, 0
    %v1210 = vsel %vm1170, 1, 0
    %v1211 = vsel %vm1171, 1, 0
    %v1212 = vsel %vm1172, 1, 0
    %vm1213 = vcmp.eq.s32.totalorder %v1205, 1
    %vm1214 = vcmp.eq.s32.totalorder %v1206, 1
    %vm1215 = vcmp.eq.s32.totalorder %v1207, 1
    %vm1216 = vcmp.eq.s32.totalorder %v1208, 1
    %vm1217 = vcmp.eq.s32.totalorder %v1209, 1
    %vm1218 = vcmp.eq.s32.totalorder %v1210, 1
    %vm1219 = vcmp.eq.s32.totalorder %v1211, 1
    %vm1220 = vcmp.eq.s32.totalorder %v1212, 1
    %v1221 = vsel %vm1213, %v1203, 0.0
    %v1222 = vsel %vm1214, %v1202, 0.0
    %v1223 = vsel %vm1215, %v1201, 0.0
    %v1224 = vsel %vm1216, %v1200, 0.0
    %v1225 = vsel %vm1217, %v1199, 0.0
    %v1226 = vsel %vm1218, %v1198, 0.0
    %v1227 = vsel %vm1219, %v1197, 0.0
    %v1228 = vsel %vm1220, %v1204, 0.0
    %v1229 = vpack.c.bf16 %v1158, %v1157
    %v1230 = vpack.c.bf16 %v1174, %v1173
    %v1231 = vpack.c.bf16 %v1110, %v1109
    %v1232 = vpack.c.bf16 %v1222, %v1221
    %v1233 = vpack.c.bf16 %v1160, %v1159
    %v1234 = vpack.c.bf16 %v1176, %v1175
    %v1235 = vpack.c.bf16 %v1112, %v1111
    %v1236 = vpack.c.bf16 %v1224, %v1223
    %v1237 = vpack.c.bf16 %v1162, %v1161
    %v1238 = vpack.c.bf16 %v1178, %v1177
    %v1239 = vpack.c.bf16 %v1114, %v1113
    %v1240 = vpack.c.bf16 %v1226, %v1225
    %v1241 = vpack.c.bf16 %v1164, %v1163
    %v1242 = vpack.c.bf16 %v1180, %v1179
    %v1243 = vpack.c.bf16 %v1116, %v1115
    %v1244 = vpack.c.bf16 %v1228, %v1227
    %v1245 = vld [vmem:[%s3] sm:$0xf]
    %v1246 = vld [vmem:[%s3 + $0x4] sm:$0xf]
    %v1247 = vld [vmem:[%s3 + $0x8] sm:$0xf]
    %v1248 = vld [vmem:[%s3 + $0xc] sm:$0xf]
    %v1249 = vld [vmem:[%s3 + $0x10] sm:$0xf]
    %v1250 = vld [vmem:[%s3 + $0x14] sm:$0xf]
    %v1251 = vld [vmem:[%s3 + $0x18] sm:$0xf]
    %v1252 = vld [vmem:[%s3 + $0x1c] sm:$0xf]
    %v1253 = vld [vmem:[%s3 + $0x20] sm:$0xf]
    %v1254 = vld [vmem:[%s3 + $0x24] sm:$0xf]
    %v1255 = vld [vmem:[%s3 + $0x28] sm:$0xf]
    %v1256 = vld [vmem:[%s3 + $0x2c] sm:$0xf]
    %v1257 = vld [vmem:[%s3 + $0x30] sm:$0xf]
    %v1258 = vld [vmem:[%s3 + $0x34] sm:$0xf]
    %v1259 = vld [vmem:[%s3 + $0x38] sm:$0xf]
    %v1260 = vld [vmem:[%s3 + $0x3c] sm:$0xf]
    %v1261 = vld [vmem:[%s3 + $0x40] sm:$0xf]
    %v1262 = vld [vmem:[%s3 + $0x44] sm:$0xf]
    %v1263 = vld [vmem:[%s3 + $0x48] sm:$0xf]
    %v1264 = vld [vmem:[%s3 + $0x4c] sm:$0xf]
    %v1265 = vld [vmem:[%s3 + $0x50] sm:$0xf]
    %v1266 = vld [vmem:[%s3 + $0x54] sm:$0xf]
    %v1267 = vld [vmem:[%s3 + $0x58] sm:$0xf]
    %v1268 = vld [vmem:[%s3 + $0x5c] sm:$0xf]
    %v1269 = vld [vmem:[%s3 + $0x60] sm:$0xf]
    %v1270 = vld [vmem:[%s3 + $0x64] sm:$0xf]
    %v1271 = vld [vmem:[%s3 + $0x68] sm:$0xf]
    %v1272 = vld [vmem:[%s3 + $0x6c] sm:$0xf]
    %v1273 = vld [vmem:[%s3 + $0x70] sm:$0xf]
    %v1274 = vld [vmem:[%s3 + $0x74] sm:$0xf]
    %v1275 = vld [vmem:[%s3 + $0x78] sm:$0xf]
    %v1276 = vld [vmem:[%s3 + $0x7c] sm:$0xf]
    %v1277 = vld [vmem:[%s3 + $0x80] sm:$0xf]
    %v1278 = vld [vmem:[%s3 + $0x84] sm:$0xf]
    %v1279 = vld [vmem:[%s3 + $0x88] sm:$0xf]
    %v1280 = vld [vmem:[%s3 + $0x8c] sm:$0xf]
    %v1281 = vld [vmem:[%s3 + $0x90] sm:$0xf]
    %v1282 = vld [vmem:[%s3 + $0x94] sm:$0xf]
    %v1283 = vld [vmem:[%s3 + $0x98] sm:$0xf]
    %v1284 = vld [vmem:[%s3 + $0x9c] sm:$0xf]
    %v1285 = vld [vmem:[%s3 + $0xa0] sm:$0xf]
    %v1286 = vld [vmem:[%s3 + $0xa4] sm:$0xf]
    %v1287 = vld [vmem:[%s3 + $0xa8] sm:$0xf]
    %v1288 = vld [vmem:[%s3 + $0xac] sm:$0xf]
    %v1289 = vld [vmem:[%s3 + $0xb0] sm:$0xf]
    %v1290 = vld [vmem:[%s3 + $0xb4] sm:$0xf]
    %v1291 = vld [vmem:[%s3 + $0xb8] sm:$0xf]
    %v1292 = vld [vmem:[%s3 + $0xbc] sm:$0xf]
    %v1293 = vld [vmem:[%s3 + $0xc0] sm:$0xf]
    %v1294 = vld [vmem:[%s3 + $0xc4] sm:$0xf]
    %v1295 = vld [vmem:[%s3 + $0xc8] sm:$0xf]
    %v1296 = vld [vmem:[%s3 + $0xcc] sm:$0xf]
    %v1297 = vld [vmem:[%s3 + $0xd0] sm:$0xf]
    %v1298 = vld [vmem:[%s3 + $0xd4] sm:$0xf]
    %v1299 = vld [vmem:[%s3 + $0xd8] sm:$0xf]
    %v1300 = vld [vmem:[%s3 + $0xdc] sm:$0xf]
    %v1301 = vld [vmem:[%s3 + $0xe0] sm:$0xf]
    %v1302 = vld [vmem:[%s3 + $0xe4] sm:$0xf]
    %v1303 = vld [vmem:[%s3 + $0xe8] sm:$0xf]
    %v1304 = vld [vmem:[%s3 + $0xec] sm:$0xf]
    %v1305 = vld [vmem:[%s3 + $0xf0] sm:$0xf]
    %v1306 = vld [vmem:[%s3 + $0xf4] sm:$0xf]
    %v1307 = vld [vmem:[%s3 + $0xf8] sm:$0xf]
    %v1308 = vld [vmem:[%s3 + $0xfc] sm:$0xf]
    %v1309 = vld [vmem:[%s4] sm:$0x1]
    %v1311 = vlaneseq
    %v1312 = vshrl.u32 %v1311, 7
    %v1313 = vsub.s32 0, %v1312
    %v1314 = vrot.slane %v1309, %v1313
    %v1380 = vunpack.c.l.b16 %v1245
    %v1381 = vunpack.c.l.b16 %v1246
    %v1382 = vunpack.c.l.b16 %v1247
    %v1383 = vunpack.c.l.b16 %v1248
    %v1384 = vunpack.c.l.b16 %v1249
    %v1385 = vunpack.c.l.b16 %v1250
    %v1386 = vunpack.c.l.b16 %v1251
    %v1387 = vunpack.c.l.b16 %v1252
    %v1388 = vunpack.c.l.b16 %v1253
    %v1389 = vunpack.c.l.b16 %v1254
    %v1390 = vunpack.c.l.b16 %v1255
    %v1391 = vunpack.c.l.b16 %v1256
    %v1392 = vunpack.c.l.b16 %v1257
    %v1393 = vunpack.c.l.b16 %v1258
    %v1394 = vunpack.c.l.b16 %v1259
    %v1395 = vunpack.c.l.b16 %v1260
    %v1396 = vunpack.c.l.b16 %v1261
    %v1397 = vunpack.c.l.b16 %v1262
    %v1398 = vunpack.c.l.b16 %v1263
    %v1399 = vunpack.c.l.b16 %v1264
    %v1400 = vunpack.c.l.b16 %v1265
    %v1401 = vunpack.c.l.b16 %v1266
    %v1402 = vunpack.c.l.b16 %v1267
    %v1403 = vunpack.c.l.b16 %v1268
    %v1404 = vunpack.c.l.b16 %v1269
    %v1405 = vunpack.c.l.b16 %v1270
    %v1406 = vunpack.c.l.b16 %v1271
    %v1407 = vunpack.c.l.b16 %v1272
    %v1408 = vunpack.c.l.b16 %v1273
    %v1409 = vunpack.c.l.b16 %v1274
    %v1410 = vunpack.c.l.b16 %v1275
    %v1411 = vunpack.c.l.b16 %v1276
    %v1412 = vunpack.c.l.b16 %v1277
    %v1413 = vunpack.c.l.b16 %v1278
    %v1414 = vunpack.c.l.b16 %v1279
    %v1415 = vunpack.c.l.b16 %v1280
    %v1416 = vunpack.c.l.b16 %v1281
    %v1417 = vunpack.c.l.b16 %v1282
    %v1418 = vunpack.c.l.b16 %v1283
    %v1419 = vunpack.c.l.b16 %v1284
    %v1420 = vunpack.c.l.b16 %v1285
    %v1421 = vunpack.c.l.b16 %v1286
    %v1422 = vunpack.c.l.b16 %v1287
    %v1423 = vunpack.c.l.b16 %v1288
    %v1424 = vunpack.c.l.b16 %v1289
    %v1425 = vunpack.c.l.b16 %v1290
    %v1426 = vunpack.c.l.b16 %v1291
    %v1427 = vunpack.c.l.b16 %v1292
    %v1428 = vunpack.c.l.b16 %v1293
    %v1429 = vunpack.c.l.b16 %v1294
    %v1430 = vunpack.c.l.b16 %v1295
    %v1431 = vunpack.c.l.b16 %v1296
    %v1432 = vunpack.c.l.b16 %v1297
    %v1433 = vunpack.c.l.b16 %v1298
    %v1434 = vunpack.c.l.b16 %v1299
    %v1435 = vunpack.c.l.b16 %v1300
    %v1436 = vunpack.c.l.b16 %v1301
    %v1437 = vunpack.c.l.b16 %v1302
    %v1438 = vunpack.c.l.b16 %v1303
    %v1439 = vunpack.c.l.b16 %v1304
    %v1440 = vunpack.c.l.b16 %v1305
    %v1441 = vunpack.c.l.b16 %v1306
    %v1442 = vunpack.c.l.b16 %v1307
    %v1443 = vunpack.c.l.b16 %v1308
    %v1444 = vpack.c.b16 %v1381, %v1380
    %v1445 = vpack.c.b16 %v1383, %v1382
    %v1446 = vpack.c.b16 %v1385, %v1384
    %v1447 = vpack.c.b16 %v1387, %v1386
    %v1448 = vpack.c.b16 %v1389, %v1388
    %v1449 = vpack.c.b16 %v1391, %v1390
    %v1450 = vpack.c.b16 %v1393, %v1392
    %v1451 = vpack.c.b16 %v1395, %v1394
    %v1452 = vpack.c.b16 %v1397, %v1396
    %v1453 = vpack.c.b16 %v1399, %v1398
    %v1454 = vpack.c.b16 %v1401, %v1400
    %v1455 = vpack.c.b16 %v1403, %v1402
    %v1456 = vpack.c.b16 %v1405, %v1404
    %v1457 = vpack.c.b16 %v1407, %v1406
    %v1458 = vpack.c.b16 %v1409, %v1408
    %v1459 = vpack.c.b16 %v1411, %v1410
    %v1460 = vpack.c.b16 %v1413, %v1412
    %v1461 = vpack.c.b16 %v1415, %v1414
    %v1462 = vpack.c.b16 %v1417, %v1416
    %v1463 = vpack.c.b16 %v1419, %v1418
    %v1464 = vpack.c.b16 %v1421, %v1420
    %v1465 = vpack.c.b16 %v1423, %v1422
    %v1466 = vpack.c.b16 %v1425, %v1424
    %v1467 = vpack.c.b16 %v1427, %v1426
    %v1468 = vpack.c.b16 %v1429, %v1428
    %v1469 = vpack.c.b16 %v1431, %v1430
    %v1470 = vpack.c.b16 %v1433, %v1432
    %v1471 = vpack.c.b16 %v1435, %v1434
    %v1472 = vpack.c.b16 %v1437, %v1436
    %v1473 = vpack.c.b16 %v1439, %v1438
    %v1474 = vpack.c.b16 %v1441, %v1440
    %v1475 = vpack.c.b16 %v1443, %v1442
    %1508 = vmatprep.subr.bf16.mxu0 0
    %1509 = vmatpush1.bf16.msra.mxu0 %v1444
    %1510 = vmatprep.subr.bf16.mxu0 0
    %1511 = vmatpush1.bf16.msra.mxu0 %v1445
    %1512 = vmatprep.subr.bf16.mxu0 0
    %1513 = vmatpush1.bf16.msra.mxu0 %v1446
    %1514 = vmatprep.subr.bf16.mxu0 0
    %1515 = vmatpush1.bf16.msra.mxu0 %v1447
    %1516 = vmatprep.subr.bf16.mxu0 0
    %1517 = vmatpush1.bf16.msra.mxu0 %v1448
    %1518 = vmatprep.subr.bf16.mxu0 0
    %1519 = vmatpush1.bf16.msra.mxu0 %v1449
    %1520 = vmatprep.subr.bf16.mxu0 0
    %1521 = vmatpush1.bf16.msra.mxu0 %v1450
    %1522 = vmatprep.subr.bf16.mxu0 0
    %1523 = vmatpush1.bf16.msra.mxu0 %v1451
    %1524 = vmatprep.subr.bf16.mxu0 0
    %1525 = vmatpush1.bf16.msra.mxu0 %v1452
    %1526 = vmatprep.subr.bf16.mxu0 0
    %1527 = vmatpush1.bf16.msra.mxu0 %v1453
    %1528 = vmatprep.subr.bf16.mxu0 0
    %1529 = vmatpush1.bf16.msra.mxu0 %v1454
    %1530 = vmatprep.subr.bf16.mxu0 0
    %1531 = vmatpush1.bf16.msra.mxu0 %v1455
    %1532 = vmatprep.subr.bf16.mxu0 0
    %1533 = vmatpush1.bf16.msra.mxu0 %v1456
    %1534 = vmatprep.subr.bf16.mxu0 0
    %1535 = vmatpush1.bf16.msra.mxu0 %v1457
    %1536 = vmatprep.subr.bf16.mxu0 0
    %1537 = vmatpush1.bf16.msra.mxu0 %v1458
    %1538 = vmatprep.subr.bf16.mxu0 0
    %1539 = vmatpush1.bf16.msra.mxu0 %v1459
    %1540 = vmatprep.mubr.bf16.mxu0 %v1230
    %1541 = vmatmul.mubr.bf16.gmra.mrb[0].mxu0 %v1229
    %v1542 = vpop.f32.mrb[0].mxu0
    %v1543 = vadd.f32 %v1314, %v1542
    %v1544 = vpop.f32.mrb[0].mxu0
    %v1545 = vpop.f32.mrb[0].mxu0
    %v1546 = vadd.f32 %v1314, %v1545
    %v1547 = vpop.f32.mrb[0].mxu0
    %1548 = vmatprep.mubr.bf16.mxu0 %v1234
    %1549 = vmatmul.mubr.bf16.gmra.mrb[0].mxu0 %v1233
    %v1550 = vpop.f32.mrb[0].mxu0
    %v1551 = vadd.f32 %v1314, %v1550
    %v1552 = vpop.f32.mrb[0].mxu0
    %v1553 = vpop.f32.mrb[0].mxu0
    %v1554 = vadd.f32 %v1314, %v1553
    %v1555 = vpop.f32.mrb[0].mxu0
    %1556 = vmatprep.mubr.bf16.mxu0 %v1238
    %1557 = vmatmul.mubr.bf16.gmra.mrb[0].mxu0 %v1237
    %v1558 = vpop.f32.mrb[0].mxu0
    %v1559 = vadd.f32 %v1314, %v1558
    %v1560 = vpop.f32.mrb[0].mxu0
    %v1561 = vpop.f32.mrb[0].mxu0
    %v1562 = vadd.f32 %v1314, %v1561
    %v1563 = vpop.f32.mrb[0].mxu0
    %1564 = vmatprep.mubr.bf16.mxu0 %v1242
    %1565 = vmatmul.mubr.bf16.gmra.mrb[0].mxu0 %v1241
    %v1566 = vpop.f32.mrb[0].mxu0
    %v1567 = vadd.f32 %v1314, %v1566
    %v1568 = vpop.f32.mrb[0].mxu0
    %v1569 = vpop.f32.mrb[0].mxu0
    %v1570 = vadd.f32 %v1314, %v1569
    %v1571 = vpop.f32.mrb[0].mxu0
    %1572 = vdwg.mxu0
    %1573 = vmatprep.subr.bf16.mxu0 0
    %1574 = vmatpush1.bf16.msra.mxu0 %v1460
    %1575 = vmatprep.subr.bf16.mxu0 0
    %1576 = vmatpush1.bf16.msra.mxu0 %v1461
    %1577 = vmatprep.subr.bf16.mxu0 0
    %1578 = vmatpush1.bf16.msra.mxu0 %v1462
    %1579 = vmatprep.subr.bf16.mxu0 0
    %1580 = vmatpush1.bf16.msra.mxu0 %v1463
    %1581 = vmatprep.subr.bf16.mxu0 0
    %1582 = vmatpush1.bf16.msra.mxu0 %v1464
    %1583 = vmatprep.subr.bf16.mxu0 0
    %1584 = vmatpush1.bf16.msra.mxu0 %v1465
    %1585 = vmatprep.subr.bf16.mxu0 0
    %1586 = vmatpush1.bf16.msra.mxu0 %v1466
    %1587 = vmatprep.subr.bf16.mxu0 0
    %1588 = vmatpush1.bf16.msra.mxu0 %v1467
    %1589 = vmatprep.subr.bf16.mxu0 0
    %1590 = vmatpush1.bf16.msra.mxu0 %v1468
    %1591 = vmatprep.subr.bf16.mxu0 0
    %1592 = vmatpush1.bf16.msra.mxu0 %v1469
    %1593 = vmatprep.subr.bf16.mxu0 0
    %1594 = vmatpush1.bf16.msra.mxu0 %v1470
    %1595 = vmatprep.subr.bf16.mxu0 0
    %1596 = vmatpush1.bf16.msra.mxu0 %v1471
    %1597 = vmatprep.subr.bf16.mxu0 0
    %1598 = vmatpush1.bf16.msra.mxu0 %v1472
    %1599 = vmatprep.subr.bf16.mxu0 0
    %1600 = vmatpush1.bf16.msra.mxu0 %v1473
    %1601 = vmatprep.subr.bf16.mxu0 0
    %1602 = vmatpush1.bf16.msra.mxu0 %v1474
    %1603 = vmatprep.subr.bf16.mxu0 0
    %1604 = vmatpush1.bf16.msra.mxu0 %v1475
    %1605 = vmatprep.mubr.bf16.mxu0 %v1232
    %1606 = vmatmul.mubr.bf16.gmra.mrb[0].mxu0 %v1231
    %v1607 = vpop.f32.mrb[0].mxu0
    %v1608 = vadd.f32 %v1543, %v1607
    %v1609 = vpop.f32.mrb[0].mxu0
    %v1610 = vpop.f32.mrb[0].mxu0
    %v1611 = vadd.f32 %v1546, %v1610
    %v1612 = vpop.f32.mrb[0].mxu0
    %1613 = vmatprep.mubr.bf16.mxu0 %v1236
    %1614 = vmatmul.mubr.bf16.gmra.mrb[0].mxu0 %v1235
    %v1615 = vpop.f32.mrb[0].mxu0
    %v1616 = vadd.f32 %v1551, %v1615
    %v1617 = vpop.f32.mrb[0].mxu0
    %v1618 = vpop.f32.mrb[0].mxu0
    %v1619 = vadd.f32 %v1554, %v1618
    %v1620 = vpop.f32.mrb[0].mxu0
    %1621 = vmatprep.mubr.bf16.mxu0 %v1240
    %1622 = vmatmul.mubr.bf16.gmra.mrb[0].mxu0 %v1239
    %v1623 = vpop.f32.mrb[0].mxu0
    %v1624 = vadd.f32 %v1559, %v1623
    %v1625 = vpop.f32.mrb[0].mxu0
    %v1626 = vpop.f32.mrb[0].mxu0
    %v1627 = vadd.f32 %v1562, %v1626
    %v1628 = vpop.f32.mrb[0].mxu0
    %1629 = vmatprep.mubr.bf16.mxu0 %v1244
    %1630 = vmatmul.mubr.bf16.gmra.mrb[0].mxu0 %v1243
    %v1631 = vpop.f32.mrb[0].mxu0
    %v1632 = vadd.f32 %v1567, %v1631
    %v1633 = vpop.f32.mrb[0].mxu0
    %v1634 = vpop.f32.mrb[0].mxu0
    %v1635 = vadd.f32 %v1570, %v1634
    %v1636 = vpop.f32.mrb[0].mxu0
    %1637 = vdwg.mxu0
    %v1638 = vmax.f32 %v1608, 0.0
    %v1639 = vmax.f32 %v1611, 0.0
    %v1640 = vmax.f32 %v1616, 0.0
    %v1641 = vmax.f32 %v1619, 0.0
    %v1642 = vmax.f32 %v1624, 0.0
    %v1643 = vmax.f32 %v1627, 0.0
    %v1644 = vmax.f32 %v1632, 0.0
    %v1645 = vmax.f32 %v1635, 0.0
    %1646 = vst [vmem:[#allocation4] sm:$0xff] %v1638
    %1647 = vst [vmem:[#allocation4 + $0x8] sm:$0xff] %v1639
    %1648 = vst [vmem:[#allocation4 + $0x10] sm:$0xff] %v1640
    %1649 = vst [vmem:[#allocation4 + $0x18] sm:$0xff] %v1641
    %1650 = vst [vmem:[#allocation4 + $0x20] sm:$0xff] %v1642
    %1651 = vst [vmem:[#allocation4 + $0x28] sm:$0xff] %v1643
    %1652 = vst [vmem:[#allocation4 + $0x30] sm:$0xff] %v1644
    %1653 = vst [vmem:[#allocation4 + $0x38] sm:$0xff] %v1645
    // Predicated region
    $region22: #{downsampling.1} parent=1 // pred_check
      _
    $region23: #{downsampling.1} parent=1 // pred_check_branch
      %1655 = sbr.rel (0) target = $region25
    $region24: #{downsampling.1} parent=1 // pred_region
      %s1657 = ssub.s32 2048, 2048
      %1658 = vsyncadd [#allocation3], %s1657
      %s1659 = sshll.u32 [#allocation2], 4
      %s1660 = int_to_ptr.vmem [resolvable:$true] %s1659
      %1665 = dma.vmem_to_hbm [thread:$0]  %s1660, 2048, %s5, [#allocation3], 128, 128, 8
    $region25: #{downsampling.1} parent=1 // pred_fallthru
      _
    // Predicated region
    $region26: #{downsampling.1} parent=1 // pred_check
      _
    $region27: #{downsampling.1} parent=1 // pred_check_branch
      %1667 = sbr.rel (0) target = $region29
    $region28: #{downsampling.1} parent=1 // pred_region
      %s1669 = ssub.s32 1024, 1024
      %1670 = vsyncadd [#allocation5], %s1669
      %s1671 = sshll.u32 [#allocation4], 4
      %s1672 = int_to_ptr.vmem [resolvable:$true] %s1671
      %1677 = dma.vmem_to_hbm [thread:$0]  %s1672, 1024, %s6, [#allocation5], 128, 128, 8
    $region29: #{downsampling.1} parent=1 // pred_fallthru
      _
    // Predicated region
    $region30: #{downsampling.1} parent=1 // pred_check
      _
    $region31: #{downsampling.1} parent=1 // pred_check_branch
      %1679 = sbr.rel (0) target = $region33
    $region32: #{downsampling.1} parent=1 // pred_region
      %1680 = dma.done [#allocation3], 2048
    $region33: #{downsampling.1} parent=1 // pred_fallthru
      _
    // Predicated region
    $region34: #{downsampling.1} parent=1 // pred_check
      _
    $region35: #{downsampling.1} parent=1 // pred_check_branch
      %1682 = sbr.rel (0) target = $region37
    $region36: #{downsampling.1} parent=1 // pred_region
      %1683 = dma.done [#allocation5], 1024
    $region37: #{downsampling.1} parent=1 // pred_fallthru
      _
    %1684 = vsyncpa [#allocation3], 1
    %1685 = vsyncpa [#allocation5], 1

</llo_original>
